<compile_context>
chip_gen: v7x
topology: tpu7x:2x2x1
jax: 0.10.0
libtpu: 0.0.40
codegen_flags: <defaults>
</compile_context>

<pallas_src>
import functools

import jax
import jax.numpy as jnp
from jax.experimental import pallas as pl
from jax.experimental.pallas import tpu as pltpu


# ----------------------------------------------------------------------------
# small helpers
# ----------------------------------------------------------------------------
def _pad_axis(a, axis, mult):
    """Zero-pad `axis` of `a` up to the next multiple of `mult`."""
    pad = (-a.shape[axis]) % mult
    if pad == 0:
        return a
    widths = [(0, 0)] * a.ndim
    widths[axis] = (0, pad)
    return jnp.pad(a, widths)


def _round_up(n, mult):
    return ((n + mult - 1) // mult) * mult


def _full_spec(shape):
    n = len(shape)
    return pl.BlockSpec(shape, lambda *_: (0,) * n)


# ----------------------------------------------------------------------------
# Pallas kernel 1: y = act(x @ w + b)   (bias + folded BN + activation fused)
# ----------------------------------------------------------------------------
def _dense_act_kernel(x_ref, w_ref, b_ref, o_ref, *, act):
    y = jnp.dot(x_ref[...], w_ref[...], preferred_element_type=jnp.float32)
    y = y + b_ref[...]  # (1, N) broadcast over rows (VMEM; vector add)
    if act == "relu":
        y = jnp.maximum(y, 0.0)
    elif act == "tanh":
        y = jnp.tanh(y)
    o_ref[...] = y.astype(o_ref.dtype)


def dense_act_pallas(x, w, b, act, *, block_m=512):
    """x: (M, K), w: (K, N), b: (N,) -> act(x @ w + b), shape (M, N).

    N is zero-padded to a multiple of 128 inside (lane-dense stores); the
    padded lanes are sliced off before returning.
    """
    M, K = x.shape
    N = w.shape[1]
    Np = _round_up(N, 128)
    wp = _pad_axis(w, 1, 128)
    bp = _pad_axis(b, 0, 128).reshape(1, Np)

    kernel = functools.partial(_dense_act_kernel, act=act)

    if M % block_m == 0 and M // block_m >= 2:
        # Large-batch path: tile M, keep K/N whole.  "parallel" -> megacore
        # sharding on v7x; BlockSpec double-buffers the HBM<->VMEM DMA.
        grid = (M // block_m,)
        in_specs = [
            pl.BlockSpec((block_m, K), lambda i: (i, 0)),
            pl.BlockSpec((K, Np), lambda i: (0, 0)),
            pl.BlockSpec((1, Np), lambda i: (0, 0)),
        ]
        out_specs = pl.BlockSpec((block_m, Np), lambda i: (i, 0))
        semantics = ("parallel",)
    else:
        # Small M: single full-array block; tiling would be pure overhead.
        grid = (1,)
        in_specs = [
            pl.BlockSpec((M, K), lambda i: (0, 0)),
            pl.BlockSpec((K, Np), lambda i: (0, 0)),
            pl.BlockSpec((1, Np), lambda i: (0, 0)),
        ]
        out_specs = pl.BlockSpec((M, Np), lambda i: (0, 0))
        semantics = ("arbitrary",)

    out = pl.pallas_call(
        kernel,
        out_shape=jax.ShapeDtypeStruct((M, Np), jnp.float32),
        grid=grid,
        in_specs=in_specs,
        out_specs=out_specs,
        compiler_params=pltpu.CompilerParams(dimension_semantics=semantics),
    )(x, wp, bp)
    return out if Np == N else out[:, :N]


def dense_act_ref(x, w, b, act):
    y = jnp.dot(x, w) + b[None, :]
    if act == "relu":
        y = jnp.maximum(y, 0.0)
    elif act == "tanh":
        y = jnp.tanh(y)
    return y


# ----------------------------------------------------------------------------
# Pallas kernel 2: fused FC heads
#   value  : v_fc1 -> relu -> v_fc2 -> tanh   (chained, intermediate stays in VMEM)
#   policy : p_fc1 -> relu
# ----------------------------------------------------------------------------
def _fc_heads_kernel(v_ref, p_ref, wv1_ref, bv1_ref, wv2_ref, bv2_ref,
                     wp1_ref, bp1_ref, v_out_ref, p_out_ref):
    h = jnp.dot(v_ref[...], wv1_ref[...], preferred_element_type=jnp.float32)
    h = jnp.maximum(h + bv1_ref[...], 0.0)
    v = jnp.dot(h, wv2_ref[...], preferred_element_type=jnp.float32)
    v_out_ref[...] = jnp.tanh(v + bv2_ref[...]).astype(v_out_ref.dtype)

    p = jnp.dot(p_ref[...], wp1_ref[...], preferred_element_type=jnp.float32)
    p_out_ref[...] = jnp.maximum(p + bp1_ref[...], 0.0).astype(p_out_ref.dtype)


def fc_heads_pallas(v_flat, p_flat, params):
    wv1, bv1 = params["v_fc1"]
    wv2, bv2 = params["v_fc2"]
    wp1, bp1 = params["p_fc1"]
    B, K = v_flat.shape
    H = wv1.shape[1]
    n_v, n_p = wv2.shape[1], wp1.shape[1]
    Nv = _round_up(n_v, 128)       # 1   -> 128  (lane-dense store)
    Npp = _round_up(n_p, 128)      # 100 -> 128

    wv2p = _pad_axis(wv2, 1, 128)
    bv2p = _pad_axis(bv2, 0, 128).reshape(1, Nv)
    wp1p = _pad_axis(wp1, 1, 128)
    bp1p = _pad_axis(bp1, 0, 128).reshape(1, Npp)
    bv1r = bv1.reshape(1, H)

    v_out, p_out = pl.pallas_call(
        _fc_heads_kernel,
        out_shape=(jax.ShapeDtypeStruct((B, Nv), jnp.float32),
                   jax.ShapeDtypeStruct((B, Npp), jnp.float32)),
        grid=(1,),
        in_specs=[_full_spec(s) for s in
                  [(B, K), (B, K), (K, H), (1, H),
                   (H, Nv), (1, Nv), (K, Npp), (1, Npp)]],
        out_specs=(_full_spec((B, Nv)), _full_spec((B, Npp))),
        compiler_params=pltpu.CompilerParams(dimension_semantics=("arbitrary",)),
    )(v_flat, p_flat, wv1, bv1r, wv2p, bv2p, wp1p, bp1p)
    return p_out[:, :n_p], v_out[:, :n_v]


def fc_heads_ref(v_flat, p_flat, params):
    wv1, bv1 = params["v_fc1"]
    wv2, bv2 = params["v_fc2"]
    wp1, bp1 = params["p_fc1"]
    h = jnp.maximum(jnp.dot(v_flat, wv1) + bv1[None, :], 0.0)
    v = jnp.tanh(jnp.dot(h, wv2) + bv2[None, :])
    p = jnp.maximum(jnp.dot(p_flat, wp1) + bp1[None, :], 0.0)
    return p, v


# ----------------------------------------------------------------------------
# Glue: im2col, BN folding, parameter init
# ----------------------------------------------------------------------------
def im2col(x_nhwc, kh, kw):
    """x: (B, H, W, C) -> (B*Ho*Wo, kh*kw*C), patch features ordered (kh, kw, cin)."""
    B, H, W, C = x_nhwc.shape
    Ho, Wo = H - kh + 1, W - kw + 1
    cols = []
    for dy in range(kh):
        for dx in range(kw):
            cols.append(x_nhwc[:, dy:dy + Ho, dx:dx + Wo, :])
    patches = jnp.concatenate(cols, axis=-1)
    return patches.reshape(B * Ho * Wo, kh * kw * C), (B, Ho, Wo)


def fold_bn(w, b, gamma, beta, mean, var, eps=1e-5):
    """Fold eval-mode BatchNorm into conv weight (..., Cout) / bias (Cout,)."""
    scale = gamma / jnp.sqrt(var + eps)
    return w * scale, (b - mean) * scale + beta


def init_params(key, input_layer, board_size):
    ks = jax.random.split(key, 40)
    i = 0

    def nxt():
        nonlocal i
        k = ks[i]
        i += 1
        return k

    def conv(cin, cout, k):
        # weight stored as (KH, KW, Cin, Cout)
        w = jax.random.normal(nxt(), (k, k, cin, cout), jnp.float32) * 0.1
        b = jax.random.normal(nxt(), (cout,), jnp.float32) * 0.05
        return w, b

    def bn(c):
        gamma = 1.0 + 0.1 * jax.random.normal(nxt(), (c,), jnp.float32)
        beta = 0.05 * jax.random.normal(nxt(), (c,), jnp.float32)
        mean = 0.05 * jax.random.normal(nxt(), (c,), jnp.float32)
        var = 1.0 + 0.1 * jnp.abs(jax.random.normal(nxt(), (c,), jnp.float32))
        return gamma, beta, mean, var

    def linear(fin, fout):
        # PyTorch Linear weight is (out, in); store transposed (in, out) for x @ W
        w = jax.random.normal(nxt(), (fin, fout), jnp.float32) * 0.05
        b = jax.random.normal(nxt(), (fout,), jnp.float32) * 0.05
        return w, b

    flatten_size = 16 * (board_size - 6) * (board_size - 6)
    p = {
        "conv1": conv(input_layer, 32, 3), "bn1": bn(32),
        "conv2": conv(32, 64, 3), "bn2": bn(64),
        "conv3": conv(64, 128, 3), "bn3": bn(128),
        "v_conv1": conv(128, 16, 1), "v_bn1": bn(16),
        "v_fc1": linear(256, 256), "v_fc2": linear(256, 1),
        "p_conv1": conv(128, 16, 1), "p_bn1": bn(16),
        "p_fc1": linear(flatten_size, board_size * board_size),
    }
    return p, flatten_size


# ----------------------------------------------------------------------------
# Forward pass (dense_fn / fc_heads_fn select Pallas or pure-jnp reference)
# ----------------------------------------------------------------------------
def forward(x_nchw, params, flatten_size, dense_fn, fc_heads_fn):
    x = jnp.transpose(x_nchw, (0, 2, 3, 1))  # NCHW -> NHWC

    def conv_bn_relu(x_nhwc, conv_p, bn_p, k):
        w, b = conv_p
        wf, bf = fold_bn(w, b, *bn_p)
        patches, (B, Ho, Wo) = im2col(x_nhwc, k, k)
        wmat = wf.reshape(k * k * wf.shape[2], wf.shape[3])
        y = dense_fn(patches, wmat, bf, "relu")
        return y.reshape(B, Ho, Wo, wf.shape[3])

    x = conv_bn_relu(x, params["conv1"], params["bn1"], 3)
    x = conv_bn_relu(x, params["conv2"], params["bn2"], 3)
    x = conv_bn_relu(x, params["conv3"], params["bn3"], 3)

    # Fused value/policy 1x1 head convs: both read the same (B*H*W, 128) input,
    # so concatenate their folded weights into one (128, 32) matmul.
    B, H, W, C = x.shape
    wv, bv = fold_bn(*params["v_conv1"], *params["v_bn1"])
    wp, bp = fold_bn(*params["p_conv1"], *params["p_bn1"])
    cv = wv.shape[3]
    w_heads = jnp.concatenate([wv.reshape(C, cv), wp.reshape(C, wp.shape[3])], axis=1)
    b_heads = jnp.concatenate([bv, bp], axis=0)
    y = dense_fn(x.reshape(B * H * W, C), w_heads, b_heads, "relu")
    y = y.reshape(B, H, W, w_heads.shape[1])

    # match torch .view(-1, flatten_size) on NCHW tensors: flatten in (C, H, W) order
    v_flat = jnp.transpose(y[..., :cv], (0, 3, 1, 2)).reshape(B, flatten_size)
    p_flat = jnp.transpose(y[..., cv:], (0, 3, 1, 2)).reshape(B, flatten_size)

    return fc_heads_fn(v_flat, p_flat, params)


# ----------------------------------------------------------------------------
if __name__ == "__main__":
    # Note: v_fc1 = Linear(256, 256) forces flatten_size == 256, i.e. board_size == 10.
    BOARD_SIZE = 10
    INPUT_LAYER = 4
    BATCH = 2

    key = jax.random.PRNGKey(0)
    kp, kx = jax.random.split(key)
    params, flatten_size = init_params(kp, INPUT_LAYER, BOARD_SIZE)

    x = jax.random.normal(kx, (BATCH, INPUT_LAYER, BOARD_SIZE, BOARD_SIZE), jnp.float32)

    fwd_pallas = jax.jit(functools.partial(
        forward, flatten_size=flatten_size,
        dense_fn=dense_act_pallas, fc_heads_fn=fc_heads_pallas))
    fwd_ref = jax.jit(functools.partial(
        forward, flatten_size=flatten_size,
        dense_fn=dense_act_ref, fc_heads_fn=fc_heads_ref))

    p_out, v_out = jax.block_until_ready(fwd_pallas(x, params))

    # correctness check against pure-jnp reference
    p_ref, v_ref = jax.block_until_ready(fwd_ref(x, params))
    assert p_out.shape == (BATCH, BOARD_SIZE * BOARD_SIZE)
    assert v_out.shape == (BATCH, 1)
    assert jnp.allclose(p_out, p_ref, rtol=1e-4, atol=1e-4)
    assert jnp.allclose(v_out, v_ref, rtol=1e-4, atol=1e-4)

    print("KERNEL_OK")
</pallas_src>

<mosaic_0001>
module attributes {stable_mosaic.version = 11 : i64} {
  func.func @_dense_act_kernel(%arg0: i32, %arg1: memref<128x36xf32, #tpu.memory_space<vmem>>, %arg2: memref<36x128xf32, #tpu.memory_space<vmem>>, %arg3: memref<1x128xf32, #tpu.memory_space<vmem>>, %arg4: memref<128x128xf32, #tpu.memory_space<vmem>>) attributes {dimension_semantics = [#tpu.dimension_semantics<arbitrary>], iteration_bounds = array<i64: 1>, scalar_prefetch = 0 : i64, scratch_operands = 0 : i64, tpu.core_type = #tpu.core_type<tc>, window_params = [{pipeline_mode = #tpu.pipeline_mode<synchronous>, transform_indices = @transform_0, window_bounds = array<i64: 128, 36>}, {pipeline_mode = #tpu.pipeline_mode<synchronous>, transform_indices = @transform_1, window_bounds = array<i64: 36, 128>}, {pipeline_mode = #tpu.pipeline_mode<synchronous>, transform_indices = @transform_2, window_bounds = array<i64: 1, 128>}, {pipeline_mode = #tpu.pipeline_mode<synchronous>, transform_indices = @transform_3, window_bounds = array<i64: 128, 128>}]} {
    %c0 = arith.constant 0 : index
    %c0_0 = arith.constant 0 : index
    %0 = vector.load %arg1[%c0, %c0_0] : memref<128x36xf32, #tpu.memory_space<vmem>>, vector<128x36xf32>
    %c0_1 = arith.constant 0 : index
    %c0_2 = arith.constant 0 : index
    %1 = vector.load %arg2[%c0_1, %c0_2] : memref<36x128xf32, #tpu.memory_space<vmem>>, vector<36x128xf32>
    %cst = arith.constant dense<0.000000e+00> : vector<128x128xf32>
    %2 = tpu.matmul %0, %1, %cst {dimension_numbers = #tpu.dot_dimension_numbers<[1], [0], [0], [1], [0, 0, 1, 1], [], []>} : vector<128x36xf32>, vector<36x128xf32>, vector<128x128xf32> -> vector<128x128xf32>
    %c0_3 = arith.constant 0 : index
    %c0_4 = arith.constant 0 : index
    %3 = vector.load %arg3[%c0_3, %c0_4] : memref<1x128xf32, #tpu.memory_space<vmem>>, vector<1x128xf32>
    %4 = vector.broadcast %3 : vector<1x128xf32> to vector<128x128xf32>
    %5 = arith.addf %2, %4 : vector<128x128xf32>
    %cst_5 = arith.constant 0.000000e+00 : f32
    %6 = vector.broadcast %cst_5 : f32 to vector<128x128xf32>
    %7 = arith.maximumf %5, %6 : vector<128x128xf32>
    %c0_6 = arith.constant 0 : index
    %c0_7 = arith.constant 0 : index
    %8 = vector.load %arg4[%c0_6, %c0_7] : memref<128x128xf32, #tpu.memory_space<vmem>>, vector<128x128xf32>
    tpu.vector_store %arg4[%c0_6, %c0_7], %7 {strides = array<i32>} : memref<128x128xf32, #tpu.memory_space<vmem>>, vector<128x128xf32>,
    return
  }
  func.func @transform_0(%arg0: i32) -> (i32, i32) {
    %c0_i32 = arith.constant 0 : i32
    %c0_i32_0 = arith.constant 0 : i32
    %c0_i32_1 = arith.constant 0 : i32
    return %c0_i32, %c0_i32_0 : i32, i32
  }
  func.func @transform_1(%arg0: i32) -> (i32, i32) {
    %c0_i32 = arith.constant 0 : i32
    %c0_i32_0 = arith.constant 0 : i32
    %c0_i32_1 = arith.constant 0 : i32
    return %c0_i32, %c0_i32_0 : i32, i32
  }
  func.func @transform_2(%arg0: i32) -> (i32, i32) {
    %c0_i32 = arith.constant 0 : i32
    %c0_i32_0 = arith.constant 0 : i32
    %c0_i32_1 = arith.constant 0 : i32
    return %c0_i32, %c0_i32_0 : i32, i32
  }
  func.func @transform_3(%arg0: i32) -> (i32, i32) {
    %c0_i32 = arith.constant 0 : i32
    %c0_i32_0 = arith.constant 0 : i32
    %c0_i32_1 = arith.constant 0 : i32
    return %c0_i32, %c0_i32_0 : i32, i32
  }
}

module attributes {stable_mosaic.version = 11 : i64} {
  func.func @_dense_act_kernel(%arg0: i32, %arg1: memref<72x288xf32, #tpu.memory_space<vmem>>, %arg2: memref<288x128xf32, #tpu.memory_space<vmem>>, %arg3: memref<1x128xf32, #tpu.memory_space<vmem>>, %arg4: memref<72x128xf32, #tpu.memory_space<vmem>>) attributes {dimension_semantics = [#tpu.dimension_semantics<arbitrary>], iteration_bounds = array<i64: 1>, scalar_prefetch = 0 : i64, scratch_operands = 0 : i64, tpu.core_type = #tpu.core_type<tc>, window_params = [{pipeline_mode = #tpu.pipeline_mode<synchronous>, transform_indices = @transform_0, window_bounds = array<i64: 72, 288>}, {pipeline_mode = #tpu.pipeline_mode<synchronous>, transform_indices = @transform_1, window_bounds = array<i64: 288, 128>}, {pipeline_mode = #tpu.pipeline_mode<synchronous>, transform_indices = @transform_2, window_bounds = array<i64: 1, 128>}, {pipeline_mode = #tpu.pipeline_mode<synchronous>, transform_indices = @transform_3, window_bounds = array<i64: 72, 128>}]} {
    %c0 = arith.constant 0 : index
    %c0_0 = arith.constant 0 : index
    %0 = vector.load %arg1[%c0, %c0_0] : memref<72x288xf32, #tpu.memory_space<vmem>>, vector<72x288xf32>
    %c0_1 = arith.constant 0 : index
    %c0_2 = arith.constant 0 : index
    %1 = vector.load %arg2[%c0_1, %c0_2] : memref<288x128xf32, #tpu.memory_space<vmem>>, vector<288x128xf32>
    %cst = arith.constant dense<0.000000e+00> : vector<72x128xf32>
    %2 = tpu.matmul %0, %1, %cst {dimension_numbers = #tpu.dot_dimension_numbers<[1], [0], [0], [1], [0, 0, 1, 1], [], []>} : vector<72x288xf32>, vector<288x128xf32>, vector<72x128xf32> -> vector<72x128xf32>
    %c0_3 = arith.constant 0 : index
    %c0_4 = arith.constant 0 : index
    %3 = vector.load %arg3[%c0_3, %c0_4] : memref<1x128xf32, #tpu.memory_space<vmem>>, vector<1x128xf32>
    %4 = vector.broadcast %3 : vector<1x128xf32> to vector<72x128xf32>
    %5 = arith.addf %2, %4 : vector<72x128xf32>
    %cst_5 = arith.constant 0.000000e+00 : f32
    %6 = vector.broadcast %cst_5 : f32 to vector<72x128xf32>
    %7 = arith.maximumf %5, %6 : vector<72x128xf32>
    %c0_6 = arith.constant 0 : index
    %c0_7 = arith.constant 0 : index
    %8 = vector.load %arg4[%c0_6, %c0_7] : memref<72x128xf32, #tpu.memory_space<vmem>>, vector<72x128xf32>
    tpu.vector_store %arg4[%c0_6, %c0_7], %7 {strides = array<i32>} : memref<72x128xf32, #tpu.memory_space<vmem>>, vector<72x128xf32>,
    return
  }
  func.func @transform_0(%arg0: i32) -> (i32, i32) {
    %c0_i32 = arith.constant 0 : i32
    %c0_i32_0 = arith.constant 0 : i32
    %c0_i32_1 = arith.constant 0 : i32
    return %c0_i32, %c0_i32_0 : i32, i32
  }
  func.func @transform_1(%arg0: i32) -> (i32, i32) {
    %c0_i32 = arith.constant 0 : i32
    %c0_i32_0 = arith.constant 0 : i32
    %c0_i32_1 = arith.constant 0 : i32
    return %c0_i32, %c0_i32_0 : i32, i32
  }
  func.func @transform_2(%arg0: i32) -> (i32, i32) {
    %c0_i32 = arith.constant 0 : i32
    %c0_i32_0 = arith.constant 0 : i32
    %c0_i32_1 = arith.constant 0 : i32
    return %c0_i32, %c0_i32_0 : i32, i32
  }
  func.func @transform_3(%arg0: i32) -> (i32, i32) {
    %c0_i32 = arith.constant 0 : i32
    %c0_i32_0 = arith.constant 0 : i32
    %c0_i32_1 = arith.constant 0 : i32
    return %c0_i32, %c0_i32_0 : i32, i32
  }
}

module attributes {stable_mosaic.version = 11 : i64} {
  func.func @_dense_act_kernel(%arg0: i32, %arg1: memref<32x576xf32, #tpu.memory_space<vmem>>, %arg2: memref<576x128xf32, #tpu.memory_space<vmem>>, %arg3: memref<1x128xf32, #tpu.memory_space<vmem>>, %arg4: memref<32x128xf32, #tpu.memory_space<vmem>>) attributes {dimension_semantics = [#tpu.dimension_semantics<arbitrary>], iteration_bounds = array<i64: 1>, scalar_prefetch = 0 : i64, scratch_operands = 0 : i64, tpu.core_type = #tpu.core_type<tc>, window_params = [{pipeline_mode = #tpu.pipeline_mode<synchronous>, transform_indices = @transform_0, window_bounds = array<i64: 32, 576>}, {pipeline_mode = #tpu.pipeline_mode<synchronous>, transform_indices = @transform_1, window_bounds = array<i64: 576, 128>}, {pipeline_mode = #tpu.pipeline_mode<synchronous>, transform_indices = @transform_2, window_bounds = array<i64: 1, 128>}, {pipeline_mode = #tpu.pipeline_mode<synchronous>, transform_indices = @transform_3, window_bounds = array<i64: 32, 128>}]} {
    %c0 = arith.constant 0 : index
    %c0_0 = arith.constant 0 : index
    %0 = vector.load %arg1[%c0, %c0_0] : memref<32x576xf32, #tpu.memory_space<vmem>>, vector<32x576xf32>
    %c0_1 = arith.constant 0 : index
    %c0_2 = arith.constant 0 : index
    %1 = vector.load %arg2[%c0_1, %c0_2] : memref<576x128xf32, #tpu.memory_space<vmem>>, vector<576x128xf32>
    %cst = arith.constant dense<0.000000e+00> : vector<32x128xf32>
    %2 = tpu.matmul %0, %1, %cst {dimension_numbers = #tpu.dot_dimension_numbers<[1], [0], [0], [1], [0, 0, 1, 1], [], []>} : vector<32x576xf32>, vector<576x128xf32>, vector<32x128xf32> -> vector<32x128xf32>
    %c0_3 = arith.constant 0 : index
    %c0_4 = arith.constant 0 : index
    %3 = vector.load %arg3[%c0_3, %c0_4] : memref<1x128xf32, #tpu.memory_space<vmem>>, vector<1x128xf32>
    %4 = vector.broadcast %3 : vector<1x128xf32> to vector<32x128xf32>
    %5 = arith.addf %2, %4 : vector<32x128xf32>
    %cst_5 = arith.constant 0.000000e+00 : f32
    %6 = vector.broadcast %cst_5 : f32 to vector<32x128xf32>
    %7 = arith.maximumf %5, %6 : vector<32x128xf32>
    %c0_6 = arith.constant 0 : index
    %c0_7 = arith.constant 0 : index
    %8 = vector.load %arg4[%c0_6, %c0_7] : memref<32x128xf32, #tpu.memory_space<vmem>>, vector<32x128xf32>
    tpu.vector_store %arg4[%c0_6, %c0_7], %7 {strides = array<i32>} : memref<32x128xf32, #tpu.memory_space<vmem>>, vector<32x128xf32>,
    return
  }
  func.func @transform_0(%arg0: i32) -> (i32, i32) {
    %c0_i32 = arith.constant 0 : i32
    %c0_i32_0 = arith.constant 0 : i32
    %c0_i32_1 = arith.constant 0 : i32
    return %c0_i32, %c0_i32_0 : i32, i32
  }
  func.func @transform_1(%arg0: i32) -> (i32, i32) {
    %c0_i32 = arith.constant 0 : i32
    %c0_i32_0 = arith.constant 0 : i32
    %c0_i32_1 = arith.constant 0 : i32
    return %c0_i32, %c0_i32_0 : i32, i32
  }
  func.func @transform_2(%arg0: i32) -> (i32, i32) {
    %c0_i32 = arith.constant 0 : i32
    %c0_i32_0 = arith.constant 0 : i32
    %c0_i32_1 = arith.constant 0 : i32
    return %c0_i32, %c0_i32_0 : i32, i32
  }
  func.func @transform_3(%arg0: i32) -> (i32, i32) {
    %c0_i32 = arith.constant 0 : i32
    %c0_i32_0 = arith.constant 0 : i32
    %c0_i32_1 = arith.constant 0 : i32
    return %c0_i32, %c0_i32_0 : i32, i32
  }
}

module attributes {stable_mosaic.version = 11 : i64} {
  func.func @_dense_act_kernel(%arg0: i32, %arg1: memref<32x128xf32, #tpu.memory_space<vmem>>, %arg2: memref<128x128xf32, #tpu.memory_space<vmem>>, %arg3: memref<1x128xf32, #tpu.memory_space<vmem>>, %arg4: memref<32x128xf32, #tpu.memory_space<vmem>>) attributes {dimension_semantics = [#tpu.dimension_semantics<arbitrary>], iteration_bounds = array<i64: 1>, scalar_prefetch = 0 : i64, scratch_operands = 0 : i64, tpu.core_type = #tpu.core_type<tc>, window_params = [{pipeline_mode = #tpu.pipeline_mode<synchronous>, transform_indices = @transform_0, window_bounds = array<i64: 32, 128>}, {pipeline_mode = #tpu.pipeline_mode<synchronous>, transform_indices = @transform_1, window_bounds = array<i64: 128, 128>}, {pipeline_mode = #tpu.pipeline_mode<synchronous>, transform_indices = @transform_2, window_bounds = array<i64: 1, 128>}, {pipeline_mode = #tpu.pipeline_mode<synchronous>, transform_indices = @transform_3, window_bounds = array<i64: 32, 128>}]} {
    %c0 = arith.constant 0 : index
    %c0_0 = arith.constant 0 : index
    %0 = vector.load %arg1[%c0, %c0_0] : memref<32x128xf32, #tpu.memory_space<vmem>>, vector<32x128xf32>
    %c0_1 = arith.constant 0 : index
    %c0_2 = arith.constant 0 : index
    %1 = vector.load %arg2[%c0_1, %c0_2] : memref<128x128xf32, #tpu.memory_space<vmem>>, vector<128x128xf32>
    %cst = arith.constant dense<0.000000e+00> : vector<32x128xf32>
    %2 = tpu.matmul %0, %1, %cst {dimension_numbers = #tpu.dot_dimension_numbers<[1], [0], [0], [1], [0, 0, 1, 1], [], []>} : vector<32x128xf32>, vector<128x128xf32>, vector<32x128xf32> -> vector<32x128xf32>
    %c0_3 = arith.constant 0 : index
    %c0_4 = arith.constant 0 : index
    %3 = vector.load %arg3[%c0_3, %c0_4] : memref<1x128xf32, #tpu.memory_space<vmem>>, vector<1x128xf32>
    %4 = vector.broadcast %3 : vector<1x128xf32> to vector<32x128xf32>
    %5 = arith.addf %2, %4 : vector<32x128xf32>
    %cst_5 = arith.constant 0.000000e+00 : f32
    %6 = vector.broadcast %cst_5 : f32 to vector<32x128xf32>
    %7 = arith.maximumf %5, %6 : vector<32x128xf32>
    %c0_6 = arith.constant 0 : index
    %c0_7 = arith.constant 0 : index
    %8 = vector.load %arg4[%c0_6, %c0_7] : memref<32x128xf32, #tpu.memory_space<vmem>>, vector<32x128xf32>
    tpu.vector_store %arg4[%c0_6, %c0_7], %7 {strides = array<i32>} : memref<32x128xf32, #tpu.memory_space<vmem>>, vector<32x128xf32>,
    return
  }
  func.func @transform_0(%arg0: i32) -> (i32, i32) {
    %c0_i32 = arith.constant 0 : i32
    %c0_i32_0 = arith.constant 0 : i32
    %c0_i32_1 = arith.constant 0 : i32
    return %c0_i32, %c0_i32_0 : i32, i32
  }
  func.func @transform_1(%arg0: i32) -> (i32, i32) {
    %c0_i32 = arith.constant 0 : i32
    %c0_i32_0 = arith.constant 0 : i32
    %c0_i32_1 = arith.constant 0 : i32
    return %c0_i32, %c0_i32_0 : i32, i32
  }
  func.func @transform_2(%arg0: i32) -> (i32, i32) {
    %c0_i32 = arith.constant 0 : i32
    %c0_i32_0 = arith.constant 0 : i32
    %c0_i32_1 = arith.constant 0 : i32
    return %c0_i32, %c0_i32_0 : i32, i32
  }
  func.func @transform_3(%arg0: i32) -> (i32, i32) {
    %c0_i32 = arith.constant 0 : i32
    %c0_i32_0 = arith.constant 0 : i32
    %c0_i32_1 = arith.constant 0 : i32
    return %c0_i32, %c0_i32_0 : i32, i32
  }
}

module attributes {stable_mosaic.version = 11 : i64} {
  func.func @_fc_heads_kernel(%arg0: i32, %arg1: memref<2x256xf32, #tpu.memory_space<vmem>>, %arg2: memref<2x256xf32, #tpu.memory_space<vmem>>, %arg3: memref<256x256xf32, #tpu.memory_space<vmem>>, %arg4: memref<1x256xf32, #tpu.memory_space<vmem>>, %arg5: memref<256x128xf32, #tpu.memory_space<vmem>>, %arg6: memref<1x128xf32, #tpu.memory_space<vmem>>, %arg7: memref<256x128xf32, #tpu.memory_space<vmem>>, %arg8: memref<1x128xf32, #tpu.memory_space<vmem>>, %arg9: memref<2x128xf32, #tpu.memory_space<vmem>>, %arg10: memref<2x128xf32, #tpu.memory_space<vmem>>) attributes {dimension_semantics = [#tpu.dimension_semantics<arbitrary>], iteration_bounds = array<i64: 1>, scalar_prefetch = 0 : i64, scratch_operands = 0 : i64, tpu.core_type = #tpu.core_type<tc>, window_params = [{pipeline_mode = #tpu.pipeline_mode<synchronous>, transform_indices = @transform_0, window_bounds = array<i64: 2, 256>}, {pipeline_mode = #tpu.pipeline_mode<synchronous>, transform_indices = @transform_1, window_bounds = array<i64: 2, 256>}, {pipeline_mode = #tpu.pipeline_mode<synchronous>, transform_indices = @transform_2, window_bounds = array<i64: 256, 256>}, {pipeline_mode = #tpu.pipeline_mode<synchronous>, transform_indices = @transform_3, window_bounds = array<i64: 1, 256>}, {pipeline_mode = #tpu.pipeline_mode<synchronous>, transform_indices = @transform_4, window_bounds = array<i64: 256, 128>}, {pipeline_mode = #tpu.pipeline_mode<synchronous>, transform_indices = @transform_5, window_bounds = array<i64: 1, 128>}, {pipeline_mode = #tpu.pipeline_mode<synchronous>, transform_indices = @transform_6, window_bounds = array<i64: 256, 128>}, {pipeline_mode = #tpu.pipeline_mode<synchronous>, transform_indices = @transform_7, window_bounds = array<i64: 1, 128>}, {pipeline_mode = #tpu.pipeline_mode<synchronous>, transform_indices = @transform_8, window_bounds = array<i64: 2, 128>}, {pipeline_mode = #tpu.pipeline_mode<synchronous>, transform_indices = @transform_9, window_bounds = array<i64: 2, 128>}]} {
    %c0 = arith.constant 0 : index
    %c0_0 = arith.constant 0 : index
    %0 = vector.load %arg1[%c0, %c0_0] : memref<2x256xf32, #tpu.memory_space<vmem>>, vector<2x256xf32>
    %c0_1 = arith.constant 0 : index
    %c0_2 = arith.constant 0 : index
    %1 = vector.load %arg3[%c0_1, %c0_2] : memref<256x256xf32, #tpu.memory_space<vmem>>, vector<256x256xf32>
    %cst = arith.constant dense<0.000000e+00> : vector<2x256xf32>
    %2 = tpu.matmul %0, %1, %cst {dimension_numbers = #tpu.dot_dimension_numbers<[1], [0], [0], [1], [0, 0, 1, 1], [], []>} : vector<2x256xf32>, vector<256x256xf32>, vector<2x256xf32> -> vector<2x256xf32>
    %c0_3 = arith.constant 0 : index
    %c0_4 = arith.constant 0 : index
    %3 = vector.load %arg4[%c0_3, %c0_4] : memref<1x256xf32, #tpu.memory_space<vmem>>, vector<1x256xf32>
    %4 = vector.broadcast %3 : vector<1x256xf32> to vector<2x256xf32>
    %5 = arith.addf %2, %4 : vector<2x256xf32>
    %cst_5 = arith.constant 0.000000e+00 : f32
    %6 = vector.broadcast %cst_5 : f32 to vector<2x256xf32>
    %7 = arith.maximumf %5, %6 : vector<2x256xf32>
    %c0_6 = arith.constant 0 : index
    %c0_7 = arith.constant 0 : index
    %8 = vector.load %arg5[%c0_6, %c0_7] : memref<256x128xf32, #tpu.memory_space<vmem>>, vector<256x128xf32>
    %cst_8 = arith.constant dense<0.000000e+00> : vector<2x128xf32>
    %9 = tpu.matmul %7, %8, %cst_8 {dimension_numbers = #tpu.dot_dimension_numbers<[1], [0], [0], [1], [0, 0, 1, 1], [], []>} : vector<2x256xf32>, vector<256x128xf32>, vector<2x128xf32> -> vector<2x128xf32>
    %c0_9 = arith.constant 0 : index
    %c0_10 = arith.constant 0 : index
    %10 = vector.load %arg6[%c0_9, %c0_10] : memref<1x128xf32, #tpu.memory_space<vmem>>, vector<1x128xf32>
    %11 = vector.broadcast %10 : vector<1x128xf32> to vector<2x128xf32>
    %12 = arith.addf %9, %11 : vector<2x128xf32>
    %13 = math.tanh %12 : vector<2x128xf32>
    %c0_11 = arith.constant 0 : index
    %c0_12 = arith.constant 0 : index
    %14 = vector.load %arg9[%c0_11, %c0_12] : memref<2x128xf32, #tpu.memory_space<vmem>>, vector<2x128xf32>
    tpu.vector_store %arg9[%c0_11, %c0_12], %13 {strides = array<i32>} : memref<2x128xf32, #tpu.memory_space<vmem>>, vector<2x128xf32>,
    %c0_13 = arith.constant 0 : index
    %c0_14 = arith.constant 0 : index
    %15 = vector.load %arg2[%c0_13, %c0_14] : memref<2x256xf32, #tpu.memory_space<vmem>>, vector<2x256xf32>
    %c0_15 = arith.constant 0 : index
    %c0_16 = arith.constant 0 : index
    %16 = vector.load %arg7[%c0_15, %c0_16] : memref<256x128xf32, #tpu.memory_space<vmem>>, vector<256x128xf32>
    %cst_17 = arith.constant dense<0.000000e+00> : vector<2x128xf32>
    %17 = tpu.matmul %15, %16, %cst_17 {dimension_numbers = #tpu.dot_dimension_numbers<[1], [0], [0], [1], [0, 0, 1, 1], [], []>} : vector<2x256xf32>, vector<256x128xf32>, vector<2x128xf32> -> vector<2x128xf32>
    %c0_18 = arith.constant 0 : index
    %c0_19 = arith.constant 0 : index
    %18 = vector.load %arg8[%c0_18, %c0_19] : memref<1x128xf32, #tpu.memory_space<vmem>>, vector<1x128xf32>
    %19 = vector.broadcast %18 : vector<1x128xf32> to vector<2x128xf32>
    %20 = arith.addf %17, %19 : vector<2x128xf32>
    %cst_20 = arith.constant 0.000000e+00 : f32
    %21 = vector.broadcast %cst_20 : f32 to vector<2x128xf32>
    %22 = arith.maximumf %20, %21 : vector<2x128xf32>
    %c0_21 = arith.constant 0 : index
    %c0_22 = arith.constant 0 : index
    %23 = vector.load %arg10[%c0_21, %c0_22] : memref<2x128xf32, #tpu.memory_space<vmem>>, vector<2x128xf32>
    tpu.vector_store %arg10[%c0_21, %c0_22], %22 {strides = array<i32>} : memref<2x128xf32, #tpu.memory_space<vmem>>, vector<2x128xf32>,
    return
  }
  func.func @transform_0(%arg0: i32) -> (i32, i32) {
    %c0_i32 = arith.constant 0 : i32
    %c0_i32_0 = arith.constant 0 : i32
    %c0_i32_1 = arith.constant 0 : i32
    return %c0_i32, %c0_i32_0 : i32, i32
  }
  func.func @transform_1(%arg0: i32) -> (i32, i32) {
    %c0_i32 = arith.constant 0 : i32
    %c0_i32_0 = arith.constant 0 : i32
    %c0_i32_1 = arith.constant 0 : i32
    return %c0_i32, %c0_i32_0 : i32, i32
  }
  func.func @transform_2(%arg0: i32) -> (i32, i32) {
    %c0_i32 = arith.constant 0 : i32
    %c0_i32_0 = arith.constant 0 : i32
    %c0_i32_1 = arith.constant 0 : i32
    return %c0_i32, %c0_i32_0 : i32, i32
  }
  func.func @transform_3(%arg0: i32) -> (i32, i32) {
    %c0_i32 = arith.constant 0 : i32
    %c0_i32_0 = arith.constant 0 : i32
    %c0_i32_1 = arith.constant 0 : i32
    return %c0_i32, %c0_i32_0 : i32, i32
  }
  func.func @transform_4(%arg0: i32) -> (i32, i32) {
    %c0_i32 = arith.constant 0 : i32
    %c0_i32_0 = arith.constant 0 : i32
    %c0_i32_1 = arith.constant 0 : i32
    return %c0_i32, %c0_i32_0 : i32, i32
  }
  func.func @transform_5(%arg0: i32) -> (i32, i32) {
    %c0_i32 = arith.constant 0 : i32
    %c0_i32_0 = arith.constant 0 : i32
    %c0_i32_1 = arith.constant 0 : i32
    return %c0_i32, %c0_i32_0 : i32, i32
  }
  func.func @transform_6(%arg0: i32) -> (i32, i32) {
    %c0_i32 = arith.constant 0 : i32
    %c0_i32_0 = arith.constant 0 : i32
    %c0_i32_1 = arith.constant 0 : i32
    return %c0_i32, %c0_i32_0 : i32, i32
  }
  func.func @transform_7(%arg0: i32) -> (i32, i32) {
    %c0_i32 = arith.constant 0 : i32
    %c0_i32_0 = arith.constant 0 : i32
    %c0_i32_1 = arith.constant 0 : i32
    return %c0_i32, %c0_i32_0 : i32, i32
  }
  func.func @transform_8(%arg0: i32) -> (i32, i32) {
    %c0_i32 = arith.constant 0 : i32
    %c0_i32_0 = arith.constant 0 : i32
    %c0_i32_1 = arith.constant 0 : i32
    return %c0_i32, %c0_i32_0 : i32, i32
  }
  func.func @transform_9(%arg0: i32) -> (i32, i32) {
    %c0_i32 = arith.constant 0 : i32
    %c0_i32_0 = arith.constant 0 : i32
    %c0_i32_1 = arith.constant 0 : i32
    return %c0_i32, %c0_i32_0 : i32, i32
  }
}

</mosaic_0001>

<llo_original>
// kernel: forward.5
$region0: #{forward.5}
  #allocation0 [shape = 'u32[]', space=smem, size = 0x4, offset = 0x4, fixed_abs, tag = 'smem constant byte address 0x4 - core index']
  #allocation1 [shape = 'u32[144,128]{1,0:T(1,128)}', space=vmem, size = 0x12000, scoped, tag = 'internal scratch']
  %s0 = inlined_call_operand.vmem [shape: f32[128,36], index: 0, kind: input, shape index: {}]
  %s1 = inlined_call_operand.vmem [shape: f32[36,128], index: 1, kind: input, shape index: {}]
  %s2 = inlined_call_operand.vmem [shape: f32[1,128], index: 2, kind: input, shape index: {}]
  %s3 = inlined_call_operand.vmem [shape: f32[128,128], index: 3, kind: output, shape index: {}]
  %s4 = sld [smem:[#allocation0]]
  $region22: #{forward.5} parent=0
    _
  %s6 = ssub.s32 1, %s4
  %s7 = scalar_select 0, %s6, %s4
  // Predicated region
  $region2: #{forward.5} parent=0 // pred_check
    _
  $region3: #{forward.5} parent=0 // pred_check_branch
    %9 = sbr.rel (0) target = $region5
  $region4: #{forward.5} parent=0 // pred_region
    _
  $region5: #{forward.5} parent=0 // pred_fallthru
    _
  // Predicated region
  $region6: #{forward.5} parent=0 // pred_check
    _
  $region7: #{forward.5} parent=0 // pred_check_branch
    %11 = sbr.rel (0) target = $region9
  $region8: #{forward.5} parent=0 // pred_region
    _
  $region9: #{forward.5} parent=0 // pred_fallthru
    _
  // Predicated region
  $region10: #{forward.5} parent=0 // pred_check
    _
  $region11: #{forward.5} parent=0 // pred_check_branch
    %13 = sbr.rel (0) target = $region13
  $region12: #{forward.5} parent=0 // pred_region
    _
  $region13: #{forward.5} parent=0 // pred_fallthru
    _
  %v14 = vld [vmem:[%s0] sm:$0xff]
  %v15 = vld [vmem:[%s0 + $0x8] sm:$0xff]
  %v16 = vld [vmem:[%s0 + $0x10] sm:$0xff]
  %v17 = vld [vmem:[%s0 + $0x18] sm:$0xff]
  %v18 = vld [vmem:[%s0 + $0x20] sm:$0xff]
  %v19 = vld [vmem:[%s0 + $0x28] sm:$0xff]
  %v20 = vld [vmem:[%s0 + $0x30] sm:$0xff]
  %v21 = vld [vmem:[%s0 + $0x38] sm:$0xff]
  %v22 = vld [vmem:[%s0 + $0x40] sm:$0xff]
  %v23 = vld [vmem:[%s0 + $0x48] sm:$0xff]
  %v24 = vld [vmem:[%s0 + $0x50] sm:$0xff]
  %v25 = vld [vmem:[%s0 + $0x58] sm:$0xff]
  %v26 = vld [vmem:[%s0 + $0x60] sm:$0xff]
  %v27 = vld [vmem:[%s0 + $0x68] sm:$0xff]
  %v28 = vld [vmem:[%s0 + $0x70] sm:$0xff]
  %v29 = vld [vmem:[%s0 + $0x78] sm:$0xff]
  %v30 = vld [vmem:[%s1] sm:$0xff]
  %v31 = vld [vmem:[%s1 + $0x8] sm:$0xff]
  %v32 = vld [vmem:[%s1 + $0x10] sm:$0xff]
  %v33 = vld [vmem:[%s1 + $0x18] sm:$0xff]
  %v34 = vld [vmem:[%s1 + $0x20] sm:$0xf]
  %v35 = vld [vmem:[%s2] sm:$0x1]
  %v37 = vlaneseq
  %v38 = vshrl.u32 %v37, 7
  %v39 = vsub.s32 0, %v38
  %v40 = vrot.slane %v35, %v39
  %vm42 = vcmask 293888
  %v44 = vsel %vm42, %v14, 0
  %v47 = vsel %vm42, %v15, 0
  %v50 = vsel %vm42, %v16, 0
  %v53 = vsel %vm42, %v17, 0
  %v56 = vsel %vm42, %v18, 0
  %v59 = vsel %vm42, %v19, 0
  %v62 = vsel %vm42, %v20, 0
  %v65 = vsel %vm42, %v21, 0
  %v68 = vsel %vm42, %v22, 0
  %v71 = vsel %vm42, %v23, 0
  %v74 = vsel %vm42, %v24, 0
  %v77 = vsel %vm42, %v25, 0
  %v80 = vsel %vm42, %v26, 0
  %v83 = vsel %vm42, %v27, 0
  %v86 = vsel %vm42, %v28, 0
  %v89 = vsel %vm42, %v29, 0
  %vm91 = vcmask 1043456
  %v93 = vsel %vm91, %v34, 0
  %95 = vmatprep.subr.mxu0 0.0
  %96 = vmatpush1.msra.mxu0 %v30
  %97 = vmatprep.subr.mxu0 0.0
  %98 = vmatpush1.msra.mxu0 %v31
  %99 = vmatprep.subr.mxu0 0.0
  %100 = vmatpush1.msra.mxu0 %v32
  %101 = vmatprep.subr.mxu0 0.0
  %102 = vmatpush1.msra.mxu0 %v33
  %103 = vmatprep.subr.mxu0 0.0
  %104 = vmatpush1.msra.mxu0 %v93
  %105 = vmatprep.subr.mxu0 0.0
  %106 = vmatpush1.msra.mxu0 0.0
  %107 = vmatprep.subr.mxu0 0.0
  %108 = vmatpush1.msra.mxu0 0.0
  %109 = vmatprep.subr.mxu0 0.0
  %110 = vmatpush1.msra.mxu0 0.0
  %111 = vmatprep.subr.mxu0 0.0
  %112 = vmatpush1.msra.mxu0 0.0
  %113 = vmatprep.subr.mxu0 0.0
  %114 = vmatpush1.msra.mxu0 0.0
  %115 = vmatprep.subr.mxu0 0.0
  %116 = vmatpush1.msra.mxu0 0.0
  %117 = vmatprep.subr.mxu0 0.0
  %118 = vmatpush1.msra.mxu0 0.0
  %119 = vmatprep.subr.mxu0 0.0
  %120 = vmatpush1.msra.mxu0 0.0
  %121 = vmatprep.subr.mxu0 0.0
  %122 = vmatpush1.msra.mxu0 0.0
  %123 = vmatprep.subr.mxu0 0.0
  %124 = vmatpush1.msra.mxu0 0.0
  %125 = vmatprep.subr.mxu0 0.0
  %126 = vmatpush1.msra.mxu0 0.0
  %127 = vmatprep.subr.mxu0 0.0
  %128 = vmatpush1.msra.mxu0 0.0
  %129 = vmatprep.subr.mxu0 0.0
  %130 = vmatpush1.msra.mxu0 0.0
  %131 = vmatprep.subr.mxu0 0.0
  %132 = vmatpush1.msra.mxu0 0.0
  %133 = vmatprep.subr.mxu0 0.0
  %134 = vmatpush1.msra.mxu0 0.0
  %135 = vmatprep.subr.mxu0 0.0
  %136 = vmatpush1.msra.mxu0 0.0
  %137 = vmatprep.subr.mxu0 0.0
  %138 = vmatpush1.msra.mxu0 0.0
  %139 = vmatprep.subr.mxu0 0.0
  %140 = vmatpush1.msra.mxu0 0.0
  %141 = vmatprep.subr.mxu0 0.0
  %142 = vmatpush1.msra.mxu0 0.0
  %143 = vmatprep.subr.mxu0 0.0
  %144 = vmatpush1.msra.mxu0 0.0
  %145 = vmatprep.subr.mxu0 0.0
  %146 = vmatpush1.msra.mxu0 0.0
  %147 = vmatprep.subr.mxu0 0.0
  %148 = vmatpush1.msra.mxu0 0.0
  %149 = vmatprep.subr.mxu0 0.0
  %150 = vmatpush1.msra.mxu0 0.0
  %151 = vmatprep.subr.mxu0 0.0
  %152 = vmatpush1.msra.mxu0 0.0
  %153 = vmatprep.subr.mxu0 0.0
  %154 = vmatpush1.msra.mxu0 0.0
  %155 = vmatprep.subr.mxu0 0.0
  %156 = vmatpush1.msra.mxu0 0.0
  %157 = vmatprep.subr.mxu0 0.0
  %158 = vmatpush1.msra.mxu0 0.0
  %159 = vmatprep.mubr.f32.mxu0 0.0
  %160 = vmatmul.mubr.f32.gmra.mrb[0].mxu0 %v44
  %v161 = vpop.f32.mrb[0].mxu0
  %v162 = vadd.f32 %v40, %v161
  %v163 = vpop.f32.mrb[0].mxu0
  %164 = vmatprep.mubr.f32.mxu0 0.0
  %165 = vmatmul.mubr.f32.gmra.mrb[0].mxu0 %v47
  %v166 = vpop.f32.mrb[0].mxu0
  %v167 = vadd.f32 %v40, %v166
  %v168 = vpop.f32.mrb[0].mxu0
  %169 = vmatprep.mubr.f32.mxu0 0.0
  %170 = vmatmul.mubr.f32.gmra.mrb[0].mxu0 %v50
  %v171 = vpop.f32.mrb[0].mxu0
  %v172 = vadd.f32 %v40, %v171
  %v173 = vpop.f32.mrb[0].mxu0
  %174 = vmatprep.mubr.f32.mxu0 0.0
  %175 = vmatmul.mubr.f32.gmra.mrb[0].mxu0 %v53
  %v176 = vpop.f32.mrb[0].mxu0
  %v177 = vadd.f32 %v40, %v176
  %v178 = vpop.f32.mrb[0].mxu0
  %179 = vmatprep.mubr.f32.mxu0 0.0
  %180 = vmatmul.mubr.f32.gmra.mrb[0].mxu0 %v56
  %v181 = vpop.f32.mrb[0].mxu0
  %v182 = vadd.f32 %v40, %v181
  %v183 = vpop.f32.mrb[0].mxu0
  %184 = vmatprep.mubr.f32.mxu0 0.0
  %185 = vmatmul.mubr.f32.gmra.mrb[0].mxu0 %v59
  %v186 = vpop.f32.mrb[0].mxu0
  %v187 = vadd.f32 %v40, %v186
  %v188 = vpop.f32.mrb[0].mxu0
  %189 = vmatprep.mubr.f32.mxu0 0.0
  %190 = vmatmul.mubr.f32.gmra.mrb[0].mxu0 %v62
  %v191 = vpop.f32.mrb[0].mxu0
  %v192 = vadd.f32 %v40, %v191
  %v193 = vpop.f32.mrb[0].mxu0
  %194 = vmatprep.mubr.f32.mxu0 0.0
  %195 = vmatmul.mubr.f32.gmra.mrb[0].mxu0 %v65
  %v196 = vpop.f32.mrb[0].mxu0
  %v197 = vadd.f32 %v40, %v196
  %v198 = vpop.f32.mrb[0].mxu0
  %199 = vmatprep.mubr.f32.mxu0 0.0
  %200 = vmatmul.mubr.f32.gmra.mrb[0].mxu0 %v68
  %v201 = vpop.f32.mrb[0].mxu0
  %v202 = vadd.f32 %v40, %v201
  %v203 = vpop.f32.mrb[0].mxu0
  %204 = vmatprep.mubr.f32.mxu0 0.0
  %205 = vmatmul.mubr.f32.gmra.mrb[0].mxu0 %v71
  %v206 = vpop.f32.mrb[0].mxu0
  %v207 = vadd.f32 %v40, %v206
  %v208 = vpop.f32.mrb[0].mxu0
  %209 = vmatprep.mubr.f32.mxu0 0.0
  %210 = vmatmul.mubr.f32.gmra.mrb[0].mxu0 %v74
  %v211 = vpop.f32.mrb[0].mxu0
  %v212 = vadd.f32 %v40, %v211
  %v213 = vpop.f32.mrb[0].mxu0
  %214 = vmatprep.mubr.f32.mxu0 0.0
  %215 = vmatmul.mubr.f32.gmra.mrb[0].mxu0 %v77
  %v216 = vpop.f32.mrb[0].mxu0
  %v217 = vadd.f32 %v40, %v216
  %v218 = vpop.f32.mrb[0].mxu0
  %219 = vmatprep.mubr.f32.mxu0 0.0
  %220 = vmatmul.mubr.f32.gmra.mrb[0].mxu0 %v80
  %v221 = vpop.f32.mrb[0].mxu0
  %v222 = vadd.f32 %v40, %v221
  %v223 = vpop.f32.mrb[0].mxu0
  %224 = vmatprep.mubr.f32.mxu0 0.0
  %225 = vmatmul.mubr.f32.gmra.mrb[0].mxu0 %v83
  %v226 = vpop.f32.mrb[0].mxu0
  %v227 = vadd.f32 %v40, %v226
  %v228 = vpop.f32.mrb[0].mxu0
  %229 = vmatprep.mubr.f32.mxu0 0.0
  %230 = vmatmul.mubr.f32.gmra.mrb[0].mxu0 %v86
  %v231 = vpop.f32.mrb[0].mxu0
  %v232 = vadd.f32 %v40, %v231
  %v233 = vpop.f32.mrb[0].mxu0
  %234 = vmatprep.mubr.f32.mxu0 0.0
  %235 = vmatmul.mubr.f32.gmra.mrb[0].mxu0 %v89
  %v236 = vpop.f32.mrb[0].mxu0
  %v237 = vadd.f32 %v40, %v236
  %v238 = vpop.f32.mrb[0].mxu0
  %239 = vdwg.mxu0
  %v240 = vmax.f32 %v162, 0.0
  %v241 = vmax.f32 %v167, 0.0
  %v242 = vmax.f32 %v172, 0.0
  %v243 = vmax.f32 %v177, 0.0
  %v244 = vmax.f32 %v182, 0.0
  %v245 = vmax.f32 %v187, 0.0
  %v246 = vmax.f32 %v192, 0.0
  %v247 = vmax.f32 %v197, 0.0
  %v248 = vmax.f32 %v202, 0.0
  %v249 = vmax.f32 %v207, 0.0
  %v250 = vmax.f32 %v212, 0.0
  %v251 = vmax.f32 %v217, 0.0
  %v252 = vmax.f32 %v222, 0.0
  %v253 = vmax.f32 %v227, 0.0
  %v254 = vmax.f32 %v232, 0.0
  %v255 = vmax.f32 %v237, 0.0
  %256 = vst [vmem:[%s3] sm:$0xff] %v240
  %257 = vst [vmem:[%s3 + $0x8] sm:$0xff] %v241
  %258 = vst [vmem:[%s3 + $0x10] sm:$0xff] %v242
  %259 = vst [vmem:[%s3 + $0x18] sm:$0xff] %v243
  %260 = vst [vmem:[%s3 + $0x20] sm:$0xff] %v244
  %261 = vst [vmem:[%s3 + $0x28] sm:$0xff] %v245
  %262 = vst [vmem:[%s3 + $0x30] sm:$0xff] %v246
  %263 = vst [vmem:[%s3 + $0x38] sm:$0xff] %v247
  %264 = vst [vmem:[%s3 + $0x40] sm:$0xff] %v248
  %265 = vst [vmem:[%s3 + $0x48] sm:$0xff] %v249
  %266 = vst [vmem:[%s3 + $0x50] sm:$0xff] %v250
  %267 = vst [vmem:[%s3 + $0x58] sm:$0xff] %v251
  %268 = vst [vmem:[%s3 + $0x60] sm:$0xff] %v252
  %269 = vst [vmem:[%s3 + $0x68] sm:$0xff] %v253
  %270 = vst [vmem:[%s3 + $0x70] sm:$0xff] %v254
  %271 = vst [vmem:[%s3 + $0x78] sm:$0xff] %v255
  // Predicated region
  $region14: #{forward.5} parent=0 // pred_check
    _
  $region15: #{forward.5} parent=0 // pred_check_branch
    %273 = sbr.rel (0) target = $region17
  $region16: #{forward.5} parent=0 // pred_region
    _
  $region17: #{forward.5} parent=0 // pred_fallthru
    _
  // Predicated region
  $region18: #{forward.5} parent=0 // pred_check
    _
  $region19: #{forward.5} parent=0 // pred_check_branch
    %275 = sbr.rel (0) target = $region21
  $region20: #{forward.5} parent=0 // pred_region
    _
  $region21: #{forward.5} parent=0 // pred_fallthru
    _

// kernel: forward.6
$region0: #{forward.6}
  #allocation0 [shape = 'u32[]', space=smem, size = 0x4, offset = 0x4, fixed_abs, tag = 'smem constant byte address 0x4 - core index']
  #allocation1 [shape = 'u32[144,128]{1,0:T(1,128)}', space=vmem, size = 0x12000, scoped, tag = 'internal scratch']
  %s0 = inlined_call_operand.vmem [shape: f32[72,288], index: 0, kind: input, shape index: {}]
  %s1 = inlined_call_operand.vmem [shape: f32[288,128], index: 1, kind: input, shape index: {}]
  %s2 = inlined_call_operand.vmem [shape: f32[1,128], index: 2, kind: input, shape index: {}]
  %s3 = inlined_call_operand.vmem [shape: f32[72,128], index: 3, kind: output, shape index: {}]
  %s4 = sld [smem:[#allocation0]]
  $region22: #{forward.6} parent=0
    _
  %s6 = ssub.s32 1, %s4
  %s7 = scalar_select 0, %s6, %s4
  // Predicated region
  $region2: #{forward.6} parent=0 // pred_check
    _
  $region3: #{forward.6} parent=0 // pred_check_branch
    %9 = sbr.rel (0) target = $region5
  $region4: #{forward.6} parent=0 // pred_region
    _
  $region5: #{forward.6} parent=0 // pred_fallthru
    _
  // Predicated region
  $region6: #{forward.6} parent=0 // pred_check
    _
  $region7: #{forward.6} parent=0 // pred_check_branch
    %11 = sbr.rel (0) target = $region9
  $region8: #{forward.6} parent=0 // pred_region
    _
  $region9: #{forward.6} parent=0 // pred_fallthru
    _
  // Predicated region
  $region10: #{forward.6} parent=0 // pred_check
    _
  $region11: #{forward.6} parent=0 // pred_check_branch
    %13 = sbr.rel (0) target = $region13
  $region12: #{forward.6} parent=0 // pred_region
    _
  $region13: #{forward.6} parent=0 // pred_fallthru
    _
  %v14 = vld [vmem:[%s0] sm:$0xff]
  %v15 = vld [vmem:[%s0 + $0x8] sm:$0xff]
  %v16 = vld [vmem:[%s0 + $0x10] sm:$0xff]
  %v17 = vld [vmem:[%s0 + $0x18] sm:$0xff]
  %v18 = vld [vmem:[%s0 + $0x20] sm:$0xff]
  %v19 = vld [vmem:[%s0 + $0x28] sm:$0xff]
  %v20 = vld [vmem:[%s0 + $0x30] sm:$0xff]
  %v21 = vld [vmem:[%s0 + $0x38] sm:$0xff]
  %v22 = vld [vmem:[%s0 + $0x40] sm:$0xff]
  %v23 = vld [vmem:[%s0 + $0x48] sm:$0xff]
  %v24 = vld [vmem:[%s0 + $0x50] sm:$0xff]
  %v25 = vld [vmem:[%s0 + $0x58] sm:$0xff]
  %v26 = vld [vmem:[%s0 + $0x60] sm:$0xff]
  %v27 = vld [vmem:[%s0 + $0x68] sm:$0xff]
  %v28 = vld [vmem:[%s0 + $0x70] sm:$0xff]
  %v29 = vld [vmem:[%s0 + $0x78] sm:$0xff]
  %v30 = vld [vmem:[%s0 + $0x80] sm:$0xff]
  %v31 = vld [vmem:[%s0 + $0x88] sm:$0xff]
  %v32 = vld [vmem:[%s0 + $0x90] sm:$0xff]
  %v33 = vld [vmem:[%s0 + $0x98] sm:$0xff]
  %v34 = vld [vmem:[%s0 + $0xa0] sm:$0xff]
  %v35 = vld [vmem:[%s0 + $0xa8] sm:$0xff]
  %v36 = vld [vmem:[%s0 + $0xb0] sm:$0xff]
  %v37 = vld [vmem:[%s0 + $0xb8] sm:$0xff]
  %v38 = vld [vmem:[%s0 + $0xc0] sm:$0xff]
  %v39 = vld [vmem:[%s0 + $0xc8] sm:$0xff]
  %v40 = vld [vmem:[%s0 + $0xd0] sm:$0xff]
  %v41 = vld [vmem:[%s1] sm:$0xff]
  %v42 = vld [vmem:[%s1 + $0x8] sm:$0xff]
  %v43 = vld [vmem:[%s1 + $0x10] sm:$0xff]
  %v44 = vld [vmem:[%s1 + $0x18] sm:$0xff]
  %v45 = vld [vmem:[%s1 + $0x20] sm:$0xff]
  %v46 = vld [vmem:[%s1 + $0x28] sm:$0xff]
  %v47 = vld [vmem:[%s1 + $0x30] sm:$0xff]
  %v48 = vld [vmem:[%s1 + $0x38] sm:$0xff]
  %v49 = vld [vmem:[%s1 + $0x40] sm:$0xff]
  %v50 = vld [vmem:[%s1 + $0x48] sm:$0xff]
  %v51 = vld [vmem:[%s1 + $0x50] sm:$0xff]
  %v52 = vld [vmem:[%s1 + $0x58] sm:$0xff]
  %v53 = vld [vmem:[%s1 + $0x60] sm:$0xff]
  %v54 = vld [vmem:[%s1 + $0x68] sm:$0xff]
  %v55 = vld [vmem:[%s1 + $0x70] sm:$0xff]
  %v56 = vld [vmem:[%s1 + $0x78] sm:$0xff]
  %v57 = vld [vmem:[%s1 + $0x80] sm:$0xff]
  %v58 = vld [vmem:[%s1 + $0x88] sm:$0xff]
  %v59 = vld [vmem:[%s1 + $0x90] sm:$0xff]
  %v60 = vld [vmem:[%s1 + $0x98] sm:$0xff]
  %v61 = vld [vmem:[%s1 + $0xa0] sm:$0xff]
  %v62 = vld [vmem:[%s1 + $0xa8] sm:$0xff]
  %v63 = vld [vmem:[%s1 + $0xb0] sm:$0xff]
  %v64 = vld [vmem:[%s1 + $0xb8] sm:$0xff]
  %v65 = vld [vmem:[%s1 + $0xc0] sm:$0xff]
  %v66 = vld [vmem:[%s1 + $0xc8] sm:$0xff]
  %v67 = vld [vmem:[%s1 + $0xd0] sm:$0xff]
  %v68 = vld [vmem:[%s1 + $0xd8] sm:$0xff]
  %v69 = vld [vmem:[%s1 + $0xe0] sm:$0xff]
  %v70 = vld [vmem:[%s1 + $0xe8] sm:$0xff]
  %v71 = vld [vmem:[%s1 + $0xf0] sm:$0xff]
  %v72 = vld [vmem:[%s1 + $0xf8] sm:$0xff]
  %v73 = vld [vmem:[%s1 + $0x100] sm:$0xff]
  %v74 = vld [vmem:[%s1 + $0x108] sm:$0xff]
  %v75 = vld [vmem:[%s1 + $0x110] sm:$0xff]
  %v76 = vld [vmem:[%s1 + $0x118] sm:$0xff]
  %v77 = vld [vmem:[%s2] sm:$0x1]
  %v79 = vlaneseq
  %v80 = vshrl.u32 %v79, 7
  %v81 = vsub.s32 0, %v80
  %v82 = vrot.slane %v77, %v81
  %vm84 = vcmask 261120
  %v86 = vsel %vm84, %v16, 0
  %v89 = vsel %vm84, %v19, 0
  %v92 = vsel %vm84, %v22, 0
  %v95 = vsel %vm84, %v25, 0
  %v98 = vsel %vm84, %v28, 0
  %v101 = vsel %vm84, %v31, 0
  %v104 = vsel %vm84, %v34, 0
  %v107 = vsel %vm84, %v37, 0
  %v110 = vsel %vm84, %v40, 0
  %112 = vmatprep.subr.mxu0 0.0
  %113 = vmatpush1.msra.mxu0 %v41
  %114 = vmatprep.subr.mxu0 0.0
  %115 = vmatpush1.msra.mxu0 %v42
  %116 = vmatprep.subr.mxu0 0.0
  %117 = vmatpush1.msra.mxu0 %v43
  %118 = vmatprep.subr.mxu0 0.0
  %119 = vmatpush1.msra.mxu0 %v44
  %120 = vmatprep.subr.mxu0 0.0
  %121 = vmatpush1.msra.mxu0 %v45
  %122 = vmatprep.subr.mxu0 0.0
  %123 = vmatpush1.msra.mxu0 %v46
  %124 = vmatprep.subr.mxu0 0.0
  %125 = vmatpush1.msra.mxu0 %v47
  %126 = vmatprep.subr.mxu0 0.0
  %127 = vmatpush1.msra.mxu0 %v48
  %128 = vmatprep.subr.mxu0 0.0
  %129 = vmatpush1.msra.mxu0 %v49
  %130 = vmatprep.subr.mxu0 0.0
  %131 = vmatpush1.msra.mxu0 %v50
  %132 = vmatprep.subr.mxu0 0.0
  %133 = vmatpush1.msra.mxu0 %v51
  %134 = vmatprep.subr.mxu0 0.0
  %135 = vmatpush1.msra.mxu0 %v52
  %136 = vmatprep.subr.mxu0 0.0
  %137 = vmatpush1.msra.mxu0 %v53
  %138 = vmatprep.subr.mxu0 0.0
  %139 = vmatpush1.msra.mxu0 %v54
  %140 = vmatprep.subr.mxu0 0.0
  %141 = vmatpush1.msra.mxu0 %v55
  %142 = vmatprep.subr.mxu0 0.0
  %143 = vmatpush1.msra.mxu0 %v56
  %144 = vmatprep.subr.mxu0 0.0
  %145 = vmatpush1.msra.mxu0 %v57
  %146 = vmatprep.subr.mxu0 0.0
  %147 = vmatpush1.msra.mxu0 %v58
  %148 = vmatprep.subr.mxu0 0.0
  %149 = vmatpush1.msra.mxu0 %v59
  %150 = vmatprep.subr.mxu0 0.0
  %151 = vmatpush1.msra.mxu0 %v60
  %152 = vmatprep.subr.mxu0 0.0
  %153 = vmatpush1.msra.mxu0 %v61
  %154 = vmatprep.subr.mxu0 0.0
  %155 = vmatpush1.msra.mxu0 %v62
  %156 = vmatprep.subr.mxu0 0.0
  %157 = vmatpush1.msra.mxu0 %v63
  %158 = vmatprep.subr.mxu0 0.0
  %159 = vmatpush1.msra.mxu0 %v64
  %160 = vmatprep.subr.mxu0 0.0
  %161 = vmatpush1.msra.mxu0 %v65
  %162 = vmatprep.subr.mxu0 0.0
  %163 = vmatpush1.msra.mxu0 %v66
  %164 = vmatprep.subr.mxu0 0.0
  %165 = vmatpush1.msra.mxu0 %v67
  %166 = vmatprep.subr.mxu0 0.0
  %167 = vmatpush1.msra.mxu0 %v68
  %168 = vmatprep.subr.mxu0 0.0
  %169 = vmatpush1.msra.mxu0 %v69
  %170 = vmatprep.subr.mxu0 0.0
  %171 = vmatpush1.msra.mxu0 %v70
  %172 = vmatprep.subr.mxu0 0.0
  %173 = vmatpush1.msra.mxu0 %v71
  %174 = vmatprep.subr.mxu0 0.0
  %175 = vmatpush1.msra.mxu0 %v72
  %176 = vmatprep.mubr.f32.mxu0 %v15
  %177 = vmatmul.mubr.f32.gmra.mrb[0].mxu0 %v14
  %v178 = vpop.f32.mrb[0].mxu0
  %v179 = vadd.f32 %v82, %v178
  %v180 = vpop.f32.mrb[0].mxu0
  %181 = vmatprep.mubr.f32.mxu0 %v18
  %182 = vmatmul.mubr.f32.gmra.mrb[0].mxu0 %v17
  %v183 = vpop.f32.mrb[0].mxu0
  %v184 = vadd.f32 %v82, %v183
  %v185 = vpop.f32.mrb[0].mxu0
  %186 = vmatprep.mubr.f32.mxu0 %v21
  %187 = vmatmul.mubr.f32.gmra.mrb[0].mxu0 %v20
  %v188 = vpop.f32.mrb[0].mxu0
  %v189 = vadd.f32 %v82, %v188
  %v190 = vpop.f32.mrb[0].mxu0
  %191 = vmatprep.mubr.f32.mxu0 %v24
  %192 = vmatmul.mubr.f32.gmra.mrb[0].mxu0 %v23
  %v193 = vpop.f32.mrb[0].mxu0
  %v194 = vadd.f32 %v82, %v193
  %v195 = vpop.f32.mrb[0].mxu0
  %196 = vmatprep.mubr.f32.mxu0 %v27
  %197 = vmatmul.mubr.f32.gmra.mrb[0].mxu0 %v26
  %v198 = vpop.f32.mrb[0].mxu0
  %v199 = vadd.f32 %v82, %v198
  %v200 = vpop.f32.mrb[0].mxu0
  %201 = vmatprep.mubr.f32.mxu0 %v30
  %202 = vmatmul.mubr.f32.gmra.mrb[0].mxu0 %v29
  %v203 = vpop.f32.mrb[0].mxu0
  %v204 = vadd.f32 %v82, %v203
  %v205 = vpop.f32.mrb[0].mxu0
  %206 = vmatprep.mubr.f32.mxu0 %v33
  %207 = vmatmul.mubr.f32.gmra.mrb[0].mxu0 %v32
  %v208 = vpop.f32.mrb[0].mxu0
  %v209 = vadd.f32 %v82, %v208
  %v210 = vpop.f32.mrb[0].mxu0
  %211 = vmatprep.mubr.f32.mxu0 %v36
  %212 = vmatmul.mubr.f32.gmra.mrb[0].mxu0 %v35
  %v213 = vpop.f32.mrb[0].mxu0
  %v214 = vadd.f32 %v82, %v213
  %v215 = vpop.f32.mrb[0].mxu0
  %216 = vmatprep.mubr.f32.mxu0 %v39
  %217 = vmatmul.mubr.f32.gmra.mrb[0].mxu0 %v38
  %v218 = vpop.f32.mrb[0].mxu0
  %v219 = vadd.f32 %v82, %v218
  %v220 = vpop.f32.mrb[0].mxu0
  %221 = vdwg.mxu0
  %222 = vmatprep.subr.mxu0 0.0
  %223 = vmatpush1.msra.mxu0 %v73
  %224 = vmatprep.subr.mxu0 0.0
  %225 = vmatpush1.msra.mxu0 %v74
  %226 = vmatprep.subr.mxu0 0.0
  %227 = vmatpush1.msra.mxu0 %v75
  %228 = vmatprep.subr.mxu0 0.0
  %229 = vmatpush1.msra.mxu0 %v76
  %230 = vmatprep.subr.mxu0 0.0
  %231 = vmatpush1.msra.mxu0 0.0
  %232 = vmatprep.subr.mxu0 0.0
  %233 = vmatpush1.msra.mxu0 0.0
  %234 = vmatprep.subr.mxu0 0.0
  %235 = vmatpush1.msra.mxu0 0.0
  %236 = vmatprep.subr.mxu0 0.0
  %237 = vmatpush1.msra.mxu0 0.0
  %238 = vmatprep.subr.mxu0 0.0
  %239 = vmatpush1.msra.mxu0 0.0
  %240 = vmatprep.subr.mxu0 0.0
  %241 = vmatpush1.msra.mxu0 0.0
  %242 = vmatprep.subr.mxu0 0.0
  %243 = vmatpush1.msra.mxu0 0.0
  %244 = vmatprep.subr.mxu0 0.0
  %245 = vmatpush1.msra.mxu0 0.0
  %246 = vmatprep.subr.mxu0 0.0
  %247 = vmatpush1.msra.mxu0 0.0
  %248 = vmatprep.subr.mxu0 0.0
  %249 = vmatpush1.msra.mxu0 0.0
  %250 = vmatprep.subr.mxu0 0.0
  %251 = vmatpush1.msra.mxu0 0.0
  %252 = vmatprep.subr.mxu0 0.0
  %253 = vmatpush1.msra.mxu0 0.0
  %254 = vmatprep.subr.mxu0 0.0
  %255 = vmatpush1.msra.mxu0 0.0
  %256 = vmatprep.subr.mxu0 0.0
  %257 = vmatpush1.msra.mxu0 0.0
  %258 = vmatprep.subr.mxu0 0.0
  %259 = vmatpush1.msra.mxu0 0.0
  %260 = vmatprep.subr.mxu0 0.0
  %261 = vmatpush1.msra.mxu0 0.0
  %262 = vmatprep.subr.mxu0 0.0
  %263 = vmatpush1.msra.mxu0 0.0
  %264 = vmatprep.subr.mxu0 0.0
  %265 = vmatpush1.msra.mxu0 0.0
  %266 = vmatprep.subr.mxu0 0.0
  %267 = vmatpush1.msra.mxu0 0.0
  %268 = vmatprep.subr.mxu0 0.0
  %269 = vmatpush1.msra.mxu0 0.0
  %270 = vmatprep.subr.mxu0 0.0
  %271 = vmatpush1.msra.mxu0 0.0
  %272 = vmatprep.subr.mxu0 0.0
  %273 = vmatpush1.msra.mxu0 0.0
  %274 = vmatprep.subr.mxu0 0.0
  %275 = vmatpush1.msra.mxu0 0.0
  %276 = vmatprep.subr.mxu0 0.0
  %277 = vmatpush1.msra.mxu0 0.0
  %278 = vmatprep.subr.mxu0 0.0
  %279 = vmatpush1.msra.mxu0 0.0
  %280 = vmatprep.subr.mxu0 0.0
  %281 = vmatpush1.msra.mxu0 0.0
  %282 = vmatprep.subr.mxu0 0.0
  %283 = vmatpush1.msra.mxu0 0.0
  %284 = vmatprep.subr.mxu0 0.0
  %285 = vmatpush1.msra.mxu0 0.0
  %286 = vmatprep.mubr.f32.mxu0 0.0
  %287 = vmatmul.mubr.f32.gmra.mrb[0].mxu0 %v86
  %v288 = vpop.f32.mrb[0].mxu0
  %v289 = vadd.f32 %v179, %v288
  %v290 = vpop.f32.mrb[0].mxu0
  %291 = vmatprep.mubr.f32.mxu0 0.0
  %292 = vmatmul.mubr.f32.gmra.mrb[0].mxu0 %v89
  %v293 = vpop.f32.mrb[0].mxu0
  %v294 = vadd.f32 %v184, %v293
  %v295 = vpop.f32.mrb[0].mxu0
  %296 = vmatprep.mubr.f32.mxu0 0.0
  %297 = vmatmul.mubr.f32.gmra.mrb[0].mxu0 %v92
  %v298 = vpop.f32.mrb[0].mxu0
  %v299 = vadd.f32 %v189, %v298
  %v300 = vpop.f32.mrb[0].mxu0
  %301 = vmatprep.mubr.f32.mxu0 0.0
  %302 = vmatmul.mubr.f32.gmra.mrb[0].mxu0 %v95
  %v303 = vpop.f32.mrb[0].mxu0
  %v304 = vadd.f32 %v194, %v303
  %v305 = vpop.f32.mrb[0].mxu0
  %306 = vmatprep.mubr.f32.mxu0 0.0
  %307 = vmatmul.mubr.f32.gmra.mrb[0].mxu0 %v98
  %v308 = vpop.f32.mrb[0].mxu0
  %v309 = vadd.f32 %v199, %v308
  %v310 = vpop.f32.mrb[0].mxu0
  %311 = vmatprep.mubr.f32.mxu0 0.0
  %312 = vmatmul.mubr.f32.gmra.mrb[0].mxu0 %v101
  %v313 = vpop.f32.mrb[0].mxu0
  %v314 = vadd.f32 %v204, %v313
  %v315 = vpop.f32.mrb[0].mxu0
  %316 = vmatprep.mubr.f32.mxu0 0.0
  %317 = vmatmul.mubr.f32.gmra.mrb[0].mxu0 %v104
  %v318 = vpop.f32.mrb[0].mxu0
  %v319 = vadd.f32 %v209, %v318
  %v320 = vpop.f32.mrb[0].mxu0
  %321 = vmatprep.mubr.f32.mxu0 0.0
  %322 = vmatmul.mubr.f32.gmra.mrb[0].mxu0 %v107
  %v323 = vpop.f32.mrb[0].mxu0
  %v324 = vadd.f32 %v214, %v323
  %v325 = vpop.f32.mrb[0].mxu0
  %326 = vmatprep.mubr.f32.mxu0 0.0
  %327 = vmatmul.mubr.f32.gmra.mrb[0].mxu0 %v110
  %v328 = vpop.f32.mrb[0].mxu0
  %v329 = vadd.f32 %v219, %v328
  %v330 = vpop.f32.mrb[0].mxu0
  %331 = vdwg.mxu0
  %v332 = vmax.f32 %v289, 0.0
  %v333 = vmax.f32 %v294, 0.0
  %v334 = vmax.f32 %v299, 0.0
  %v335 = vmax.f32 %v304, 0.0
  %v336 = vmax.f32 %v309, 0.0
  %v337 = vmax.f32 %v314, 0.0
  %v338 = vmax.f32 %v319, 0.0
  %v339 = vmax.f32 %v324, 0.0
  %v340 = vmax.f32 %v329, 0.0
  %341 = vst [vmem:[%s3] sm:$0xff] %v332
  %342 = vst [vmem:[%s3 + $0x8] sm:$0xff] %v333
  %343 = vst [vmem:[%s3 + $0x10] sm:$0xff] %v334
  %344 = vst [vmem:[%s3 + $0x18] sm:$0xff] %v335
  %345 = vst [vmem:[%s3 + $0x20] sm:$0xff] %v336
  %346 = vst [vmem:[%s3 + $0x28] sm:$0xff] %v337
  %347 = vst [vmem:[%s3 + $0x30] sm:$0xff] %v338
  %348 = vst [vmem:[%s3 + $0x38] sm:$0xff] %v339
  %349 = vst [vmem:[%s3 + $0x40] sm:$0xff] %v340
  // Predicated region
  $region14: #{forward.6} parent=0 // pred_check
    _
  $region15: #{forward.6} parent=0 // pred_check_branch
    %351 = sbr.rel (0) target = $region17
  $region16: #{forward.6} parent=0 // pred_region
    _
  $region17: #{forward.6} parent=0 // pred_fallthru
    _
  // Predicated region
  $region18: #{forward.6} parent=0 // pred_check
    _
  $region19: #{forward.6} parent=0 // pred_check_branch
    %353 = sbr.rel (0) target = $region21
  $region20: #{forward.6} parent=0 // pred_region
    _
  $region21: #{forward.6} parent=0 // pred_fallthru
    _

// kernel: forward.7
$region0: #{forward.7}
  #allocation0 [shape = 'u32[]', space=smem, size = 0x4, offset = 0x4, fixed_abs, tag = 'smem constant byte address 0x4 - core index']
  #allocation1 [shape = 'u32[144,128]{1,0:T(1,128)}', space=vmem, size = 0x12000, scoped, tag = 'internal scratch']
  %s0 = inlined_call_operand.vmem [shape: f32[32,576], index: 0, kind: input, shape index: {}]
  %s1 = inlined_call_operand.vmem [shape: f32[576,128], index: 1, kind: input, shape index: {}]
  %s2 = inlined_call_operand.vmem [shape: f32[1,128], index: 2, kind: input, shape index: {}]
  %s3 = inlined_call_operand.vmem [shape: f32[32,128], index: 3, kind: output, shape index: {}]
  %s4 = sld [smem:[#allocation0]]
  $region22: #{forward.7} parent=0
    _
  %s6 = ssub.s32 1, %s4
  %s7 = scalar_select 0, %s6, %s4
  // Predicated region
  $region2: #{forward.7} parent=0 // pred_check
    _
  $region3: #{forward.7} parent=0 // pred_check_branch
    %9 = sbr.rel (0) target = $region5
  $region4: #{forward.7} parent=0 // pred_region
    _
  $region5: #{forward.7} parent=0 // pred_fallthru
    _
  // Predicated region
  $region6: #{forward.7} parent=0 // pred_check
    _
  $region7: #{forward.7} parent=0 // pred_check_branch
    %11 = sbr.rel (0) target = $region9
  $region8: #{forward.7} parent=0 // pred_region
    _
  $region9: #{forward.7} parent=0 // pred_fallthru
    _
  // Predicated region
  $region10: #{forward.7} parent=0 // pred_check
    _
  $region11: #{forward.7} parent=0 // pred_check_branch
    %13 = sbr.rel (0) target = $region13
  $region12: #{forward.7} parent=0 // pred_region
    _
  $region13: #{forward.7} parent=0 // pred_fallthru
    _
  %v14 = vld [vmem:[%s0] sm:$0xff]
  %v15 = vld [vmem:[%s0 + $0x8] sm:$0xff]
  %v16 = vld [vmem:[%s0 + $0x10] sm:$0xff]
  %v17 = vld [vmem:[%s0 + $0x18] sm:$0xff]
  %v18 = vld [vmem:[%s0 + $0x20] sm:$0xff]
  %v19 = vld [vmem:[%s0 + $0x28] sm:$0xff]
  %v20 = vld [vmem:[%s0 + $0x30] sm:$0xff]
  %v21 = vld [vmem:[%s0 + $0x38] sm:$0xff]
  %v22 = vld [vmem:[%s0 + $0x40] sm:$0xff]
  %v23 = vld [vmem:[%s0 + $0x48] sm:$0xff]
  %v24 = vld [vmem:[%s0 + $0x50] sm:$0xff]
  %v25 = vld [vmem:[%s0 + $0x58] sm:$0xff]
  %v26 = vld [vmem:[%s0 + $0x60] sm:$0xff]
  %v27 = vld [vmem:[%s0 + $0x68] sm:$0xff]
  %v28 = vld [vmem:[%s0 + $0x70] sm:$0xff]
  %v29 = vld [vmem:[%s0 + $0x78] sm:$0xff]
  %v30 = vld [vmem:[%s0 + $0x80] sm:$0xff]
  %v31 = vld [vmem:[%s0 + $0x88] sm:$0xff]
  %v32 = vld [vmem:[%s0 + $0x90] sm:$0xff]
  %v33 = vld [vmem:[%s0 + $0x98] sm:$0xff]
  %v34 = vld [vmem:[%s1] sm:$0xff]
  %v35 = vld [vmem:[%s1 + $0x8] sm:$0xff]
  %v36 = vld [vmem:[%s1 + $0x10] sm:$0xff]
  %v37 = vld [vmem:[%s1 + $0x18] sm:$0xff]
  %v38 = vld [vmem:[%s1 + $0x20] sm:$0xff]
  %v39 = vld [vmem:[%s1 + $0x28] sm:$0xff]
  %v40 = vld [vmem:[%s1 + $0x30] sm:$0xff]
  %v41 = vld [vmem:[%s1 + $0x38] sm:$0xff]
  %v42 = vld [vmem:[%s1 + $0x40] sm:$0xff]
  %v43 = vld [vmem:[%s1 + $0x48] sm:$0xff]
  %v44 = vld [vmem:[%s1 + $0x50] sm:$0xff]
  %v45 = vld [vmem:[%s1 + $0x58] sm:$0xff]
  %v46 = vld [vmem:[%s1 + $0x60] sm:$0xff]
  %v47 = vld [vmem:[%s1 + $0x68] sm:$0xff]
  %v48 = vld [vmem:[%s1 + $0x70] sm:$0xff]
  %v49 = vld [vmem:[%s1 + $0x78] sm:$0xff]
  %v50 = vld [vmem:[%s1 + $0x80] sm:$0xff]
  %v51 = vld [vmem:[%s1 + $0x88] sm:$0xff]
  %v52 = vld [vmem:[%s1 + $0x90] sm:$0xff]
  %v53 = vld [vmem:[%s1 + $0x98] sm:$0xff]
  %v54 = vld [vmem:[%s1 + $0xa0] sm:$0xff]
  %v55 = vld [vmem:[%s1 + $0xa8] sm:$0xff]
  %v56 = vld [vmem:[%s1 + $0xb0] sm:$0xff]
  %v57 = vld [vmem:[%s1 + $0xb8] sm:$0xff]
  %v58 = vld [vmem:[%s1 + $0xc0] sm:$0xff]
  %v59 = vld [vmem:[%s1 + $0xc8] sm:$0xff]
  %v60 = vld [vmem:[%s1 + $0xd0] sm:$0xff]
  %v61 = vld [vmem:[%s1 + $0xd8] sm:$0xff]
  %v62 = vld [vmem:[%s1 + $0xe0] sm:$0xff]
  %v63 = vld [vmem:[%s1 + $0xe8] sm:$0xff]
  %v64 = vld [vmem:[%s1 + $0xf0] sm:$0xff]
  %v65 = vld [vmem:[%s1 + $0xf8] sm:$0xff]
  %v66 = vld [vmem:[%s1 + $0x100] sm:$0xff]
  %v67 = vld [vmem:[%s1 + $0x108] sm:$0xff]
  %v68 = vld [vmem:[%s1 + $0x110] sm:$0xff]
  %v69 = vld [vmem:[%s1 + $0x118] sm:$0xff]
  %v70 = vld [vmem:[%s1 + $0x120] sm:$0xff]
  %v71 = vld [vmem:[%s1 + $0x128] sm:$0xff]
  %v72 = vld [vmem:[%s1 + $0x130] sm:$0xff]
  %v73 = vld [vmem:[%s1 + $0x138] sm:$0xff]
  %v74 = vld [vmem:[%s1 + $0x140] sm:$0xff]
  %v75 = vld [vmem:[%s1 + $0x148] sm:$0xff]
  %v76 = vld [vmem:[%s1 + $0x150] sm:$0xff]
  %v77 = vld [vmem:[%s1 + $0x158] sm:$0xff]
  %v78 = vld [vmem:[%s1 + $0x160] sm:$0xff]
  %v79 = vld [vmem:[%s1 + $0x168] sm:$0xff]
  %v80 = vld [vmem:[%s1 + $0x170] sm:$0xff]
  %v81 = vld [vmem:[%s1 + $0x178] sm:$0xff]
  %v82 = vld [vmem:[%s1 + $0x180] sm:$0xff]
  %v83 = vld [vmem:[%s1 + $0x188] sm:$0xff]
  %v84 = vld [vmem:[%s1 + $0x190] sm:$0xff]
  %v85 = vld [vmem:[%s1 + $0x198] sm:$0xff]
  %v86 = vld [vmem:[%s1 + $0x1a0] sm:$0xff]
  %v87 = vld [vmem:[%s1 + $0x1a8] sm:$0xff]
  %v88 = vld [vmem:[%s1 + $0x1b0] sm:$0xff]
  %v89 = vld [vmem:[%s1 + $0x1b8] sm:$0xff]
  %v90 = vld [vmem:[%s1 + $0x1c0] sm:$0xff]
  %v91 = vld [vmem:[%s1 + $0x1c8] sm:$0xff]
  %v92 = vld [vmem:[%s1 + $0x1d0] sm:$0xff]
  %v93 = vld [vmem:[%s1 + $0x1d8] sm:$0xff]
  %v94 = vld [vmem:[%s1 + $0x1e0] sm:$0xff]
  %v95 = vld [vmem:[%s1 + $0x1e8] sm:$0xff]
  %v96 = vld [vmem:[%s1 + $0x1f0] sm:$0xff]
  %v97 = vld [vmem:[%s1 + $0x1f8] sm:$0xff]
  %v98 = vld [vmem:[%s1 + $0x200] sm:$0xff]
  %v99 = vld [vmem:[%s1 + $0x208] sm:$0xff]
  %v100 = vld [vmem:[%s1 + $0x210] sm:$0xff]
  %v101 = vld [vmem:[%s1 + $0x218] sm:$0xff]
  %v102 = vld [vmem:[%s1 + $0x220] sm:$0xff]
  %v103 = vld [vmem:[%s1 + $0x228] sm:$0xff]
  %v104 = vld [vmem:[%s1 + $0x230] sm:$0xff]
  %v105 = vld [vmem:[%s1 + $0x238] sm:$0xff]
  %v106 = vld [vmem:[%s2] sm:$0x1]
  %v108 = vlaneseq
  %v109 = vshrl.u32 %v108, 7
  %v110 = vsub.s32 0, %v109
  %v111 = vrot.slane %v106, %v110
  %vm113 = vcmask 523264
  %v115 = vsel %vm113, %v18, 0
  %v118 = vsel %vm113, %v23, 0
  %v121 = vsel %vm113, %v28, 0
  %v124 = vsel %vm113, %v33, 0
  %126 = vmatprep.subr.mxu0 0.0
  %127 = vmatpush1.msra.mxu0 %v34
  %128 = vmatprep.subr.mxu0 0.0
  %129 = vmatpush1.msra.mxu0 %v35
  %130 = vmatprep.subr.mxu0 0.0
  %131 = vmatpush1.msra.mxu0 %v36
  %132 = vmatprep.subr.mxu0 0.0
  %133 = vmatpush1.msra.mxu0 %v37
  %134 = vmatprep.subr.mxu0 0.0
  %135 = vmatpush1.msra.mxu0 %v38
  %136 = vmatprep.subr.mxu0 0.0
  %137 = vmatpush1.msra.mxu0 %v39
  %138 = vmatprep.subr.mxu0 0.0
  %139 = vmatpush1.msra.mxu0 %v40
  %140 = vmatprep.subr.mxu0 0.0
  %141 = vmatpush1.msra.mxu0 %v41
  %142 = vmatprep.subr.mxu0 0.0
  %143 = vmatpush1.msra.mxu0 %v42
  %144 = vmatprep.subr.mxu0 0.0
  %145 = vmatpush1.msra.mxu0 %v43
  %146 = vmatprep.subr.mxu0 0.0
  %147 = vmatpush1.msra.mxu0 %v44
  %148 = vmatprep.subr.mxu0 0.0
  %149 = vmatpush1.msra.mxu0 %v45
  %150 = vmatprep.subr.mxu0 0.0
  %151 = vmatpush1.msra.mxu0 %v46
  %152 = vmatprep.subr.mxu0 0.0
  %153 = vmatpush1.msra.mxu0 %v47
  %154 = vmatprep.subr.mxu0 0.0
  %155 = vmatpush1.msra.mxu0 %v48
  %156 = vmatprep.subr.mxu0 0.0
  %157 = vmatpush1.msra.mxu0 %v49
  %158 = vmatprep.subr.mxu0 0.0
  %159 = vmatpush1.msra.mxu0 %v50
  %160 = vmatprep.subr.mxu0 0.0
  %161 = vmatpush1.msra.mxu0 %v51
  %162 = vmatprep.subr.mxu0 0.0
  %163 = vmatpush1.msra.mxu0 %v52
  %164 = vmatprep.subr.mxu0 0.0
  %165 = vmatpush1.msra.mxu0 %v53
  %166 = vmatprep.subr.mxu0 0.0
  %167 = vmatpush1.msra.mxu0 %v54
  %168 = vmatprep.subr.mxu0 0.0
  %169 = vmatpush1.msra.mxu0 %v55
  %170 = vmatprep.subr.mxu0 0.0
  %171 = vmatpush1.msra.mxu0 %v56
  %172 = vmatprep.subr.mxu0 0.0
  %173 = vmatpush1.msra.mxu0 %v57
  %174 = vmatprep.subr.mxu0 0.0
  %175 = vmatpush1.msra.mxu0 %v58
  %176 = vmatprep.subr.mxu0 0.0
  %177 = vmatpush1.msra.mxu0 %v59
  %178 = vmatprep.subr.mxu0 0.0
  %179 = vmatpush1.msra.mxu0 %v60
  %180 = vmatprep.subr.mxu0 0.0
  %181 = vmatpush1.msra.mxu0 %v61
  %182 = vmatprep.subr.mxu0 0.0
  %183 = vmatpush1.msra.mxu0 %v62
  %184 = vmatprep.subr.mxu0 0.0
  %185 = vmatpush1.msra.mxu0 %v63
  %186 = vmatprep.subr.mxu0 0.0
  %187 = vmatpush1.msra.mxu0 %v64
  %188 = vmatprep.subr.mxu0 0.0
  %189 = vmatpush1.msra.mxu0 %v65
  %190 = vmatprep.mubr.f32.mxu0 %v15
  %191 = vmatmul.mubr.f32.gmra.mrb[0].mxu0 %v14
  %v192 = vpop.f32.mrb[0].mxu0
  %v193 = vadd.f32 %v111, %v192
  %v194 = vpop.f32.mrb[0].mxu0
  %195 = vmatprep.mubr.f32.mxu0 %v20
  %196 = vmatmul.mubr.f32.gmra.mrb[0].mxu0 %v19
  %v197 = vpop.f32.mrb[0].mxu0
  %v198 = vadd.f32 %v111, %v197
  %v199 = vpop.f32.mrb[0].mxu0
  %200 = vmatprep.mubr.f32.mxu0 %v25
  %201 = vmatmul.mubr.f32.gmra.mrb[0].mxu0 %v24
  %v202 = vpop.f32.mrb[0].mxu0
  %v203 = vadd.f32 %v111, %v202
  %v204 = vpop.f32.mrb[0].mxu0
  %205 = vmatprep.mubr.f32.mxu0 %v30
  %206 = vmatmul.mubr.f32.gmra.mrb[0].mxu0 %v29
  %v207 = vpop.f32.mrb[0].mxu0
  %v208 = vadd.f32 %v111, %v207
  %v209 = vpop.f32.mrb[0].mxu0
  %210 = vdwg.mxu0
  %211 = vmatprep.subr.mxu0 0.0
  %212 = vmatpush1.msra.mxu0 %v66
  %213 = vmatprep.subr.mxu0 0.0
  %214 = vmatpush1.msra.mxu0 %v67
  %215 = vmatprep.subr.mxu0 0.0
  %216 = vmatpush1.msra.mxu0 %v68
  %217 = vmatprep.subr.mxu0 0.0
  %218 = vmatpush1.msra.mxu0 %v69
  %219 = vmatprep.subr.mxu0 0.0
  %220 = vmatpush1.msra.mxu0 %v70
  %221 = vmatprep.subr.mxu0 0.0
  %222 = vmatpush1.msra.mxu0 %v71
  %223 = vmatprep.subr.mxu0 0.0
  %224 = vmatpush1.msra.mxu0 %v72
  %225 = vmatprep.subr.mxu0 0.0
  %226 = vmatpush1.msra.mxu0 %v73
  %227 = vmatprep.subr.mxu0 0.0
  %228 = vmatpush1.msra.mxu0 %v74
  %229 = vmatprep.subr.mxu0 0.0
  %230 = vmatpush1.msra.mxu0 %v75
  %231 = vmatprep.subr.mxu0 0.0
  %232 = vmatpush1.msra.mxu0 %v76
  %233 = vmatprep.subr.mxu0 0.0
  %234 = vmatpush1.msra.mxu0 %v77
  %235 = vmatprep.subr.mxu0 0.0
  %236 = vmatpush1.msra.mxu0 %v78
  %237 = vmatprep.subr.mxu0 0.0
  %238 = vmatpush1.msra.mxu0 %v79
  %239 = vmatprep.subr.mxu0 0.0
  %240 = vmatpush1.msra.mxu0 %v80
  %241 = vmatprep.subr.mxu0 0.0
  %242 = vmatpush1.msra.mxu0 %v81
  %243 = vmatprep.subr.mxu0 0.0
  %244 = vmatpush1.msra.mxu0 %v82
  %245 = vmatprep.subr.mxu0 0.0
  %246 = vmatpush1.msra.mxu0 %v83
  %247 = vmatprep.subr.mxu0 0.0
  %248 = vmatpush1.msra.mxu0 %v84
  %249 = vmatprep.subr.mxu0 0.0
  %250 = vmatpush1.msra.mxu0 %v85
  %251 = vmatprep.subr.mxu0 0.0
  %252 = vmatpush1.msra.mxu0 %v86
  %253 = vmatprep.subr.mxu0 0.0
  %254 = vmatpush1.msra.mxu0 %v87
  %255 = vmatprep.subr.mxu0 0.0
  %256 = vmatpush1.msra.mxu0 %v88
  %257 = vmatprep.subr.mxu0 0.0
  %258 = vmatpush1.msra.mxu0 %v89
  %259 = vmatprep.subr.mxu0 0.0
  %260 = vmatpush1.msra.mxu0 %v90
  %261 = vmatprep.subr.mxu0 0.0
  %262 = vmatpush1.msra.mxu0 %v91
  %263 = vmatprep.subr.mxu0 0.0
  %264 = vmatpush1.msra.mxu0 %v92
  %265 = vmatprep.subr.mxu0 0.0
  %266 = vmatpush1.msra.mxu0 %v93
  %267 = vmatprep.subr.mxu0 0.0
  %268 = vmatpush1.msra.mxu0 %v94
  %269 = vmatprep.subr.mxu0 0.0
  %270 = vmatpush1.msra.mxu0 %v95
  %271 = vmatprep.subr.mxu0 0.0
  %272 = vmatpush1.msra.mxu0 %v96
  %273 = vmatprep.subr.mxu0 0.0
  %274 = vmatpush1.msra.mxu0 %v97
  %275 = vmatprep.mubr.f32.mxu0 %v17
  %276 = vmatmul.mubr.f32.gmra.mrb[0].mxu0 %v16
  %v277 = vpop.f32.mrb[0].mxu0
  %v278 = vadd.f32 %v193, %v277
  %v279 = vpop.f32.mrb[0].mxu0
  %280 = vmatprep.mubr.f32.mxu0 %v22
  %281 = vmatmul.mubr.f32.gmra.mrb[0].mxu0 %v21
  %v282 = vpop.f32.mrb[0].mxu0
  %v283 = vadd.f32 %v198, %v282
  %v284 = vpop.f32.mrb[0].mxu0
  %285 = vmatprep.mubr.f32.mxu0 %v27
  %286 = vmatmul.mubr.f32.gmra.mrb[0].mxu0 %v26
  %v287 = vpop.f32.mrb[0].mxu0
  %v288 = vadd.f32 %v203, %v287
  %v289 = vpop.f32.mrb[0].mxu0
  %290 = vmatprep.mubr.f32.mxu0 %v32
  %291 = vmatmul.mubr.f32.gmra.mrb[0].mxu0 %v31
  %v292 = vpop.f32.mrb[0].mxu0
  %v293 = vadd.f32 %v208, %v292
  %v294 = vpop.f32.mrb[0].mxu0
  %295 = vdwg.mxu0
  %296 = vmatprep.subr.mxu0 0.0
  %297 = vmatpush1.msra.mxu0 %v98
  %298 = vmatprep.subr.mxu0 0.0
  %299 = vmatpush1.msra.mxu0 %v99
  %300 = vmatprep.subr.mxu0 0.0
  %301 = vmatpush1.msra.mxu0 %v100
  %302 = vmatprep.subr.mxu0 0.0
  %303 = vmatpush1.msra.mxu0 %v101
  %304 = vmatprep.subr.mxu0 0.0
  %305 = vmatpush1.msra.mxu0 %v102
  %306 = vmatprep.subr.mxu0 0.0
  %307 = vmatpush1.msra.mxu0 %v103
  %308 = vmatprep.subr.mxu0 0.0
  %309 = vmatpush1.msra.mxu0 %v104
  %310 = vmatprep.subr.mxu0 0.0
  %311 = vmatpush1.msra.mxu0 %v105
  %312 = vmatprep.subr.mxu0 0.0
  %313 = vmatpush1.msra.mxu0 0.0
  %314 = vmatprep.subr.mxu0 0.0
  %315 = vmatpush1.msra.mxu0 0.0
  %316 = vmatprep.subr.mxu0 0.0
  %317 = vmatpush1.msra.mxu0 0.0
  %318 = vmatprep.subr.mxu0 0.0
  %319 = vmatpush1.msra.mxu0 0.0
  %320 = vmatprep.subr.mxu0 0.0
  %321 = vmatpush1.msra.mxu0 0.0
  %322 = vmatprep.subr.mxu0 0.0
  %323 = vmatpush1.msra.mxu0 0.0
  %324 = vmatprep.subr.mxu0 0.0
  %325 = vmatpush1.msra.mxu0 0.0
  %326 = vmatprep.subr.mxu0 0.0
  %327 = vmatpush1.msra.mxu0 0.0
  %328 = vmatprep.subr.mxu0 0.0
  %329 = vmatpush1.msra.mxu0 0.0
  %330 = vmatprep.subr.mxu0 0.0
  %331 = vmatpush1.msra.mxu0 0.0
  %332 = vmatprep.subr.mxu0 0.0
  %333 = vmatpush1.msra.mxu0 0.0
  %334 = vmatprep.subr.mxu0 0.0
  %335 = vmatpush1.msra.mxu0 0.0
  %336 = vmatprep.subr.mxu0 0.0
  %337 = vmatpush1.msra.mxu0 0.0
  %338 = vmatprep.subr.mxu0 0.0
  %339 = vmatpush1.msra.mxu0 0.0
  %340 = vmatprep.subr.mxu0 0.0
  %341 = vmatpush1.msra.mxu0 0.0
  %342 = vmatprep.subr.mxu0 0.0
  %343 = vmatpush1.msra.mxu0 0.0
  %344 = vmatprep.subr.mxu0 0.0
  %345 = vmatpush1.msra.mxu0 0.0
  %346 = vmatprep.subr.mxu0 0.0
  %347 = vmatpush1.msra.mxu0 0.0
  %348 = vmatprep.subr.mxu0 0.0
  %349 = vmatpush1.msra.mxu0 0.0
  %350 = vmatprep.subr.mxu0 0.0
  %351 = vmatpush1.msra.mxu0 0.0
  %352 = vmatprep.subr.mxu0 0.0
  %353 = vmatpush1.msra.mxu0 0.0
  %354 = vmatprep.subr.mxu0 0.0
  %355 = vmatpush1.msra.mxu0 0.0
  %356 = vmatprep.subr.mxu0 0.0
  %357 = vmatpush1.msra.mxu0 0.0
  %358 = vmatprep.subr.mxu0 0.0
  %359 = vmatpush1.msra.mxu0 0.0
  %360 = vmatprep.mubr.f32.mxu0 0.0
  %361 = vmatmul.mubr.f32.gmra.mrb[0].mxu0 %v115
  %v362 = vpop.f32.mrb[0].mxu0
  %v363 = vadd.f32 %v278, %v362
  %v364 = vpop.f32.mrb[0].mxu0
  %365 = vmatprep.mubr.f32.mxu0 0.0
  %366 = vmatmul.mubr.f32.gmra.mrb[0].mxu0 %v118
  %v367 = vpop.f32.mrb[0].mxu0
  %v368 = vadd.f32 %v283, %v367
  %v369 = vpop.f32.mrb[0].mxu0
  %370 = vmatprep.mubr.f32.mxu0 0.0
  %371 = vmatmul.mubr.f32.gmra.mrb[0].mxu0 %v121
  %v372 = vpop.f32.mrb[0].mxu0
  %v373 = vadd.f32 %v288, %v372
  %v374 = vpop.f32.mrb[0].mxu0
  %375 = vmatprep.mubr.f32.mxu0 0.0
  %376 = vmatmul.mubr.f32.gmra.mrb[0].mxu0 %v124
  %v377 = vpop.f32.mrb[0].mxu0
  %v378 = vadd.f32 %v293, %v377
  %v379 = vpop.f32.mrb[0].mxu0
  %380 = vdwg.mxu0
  %v381 = vmax.f32 %v363, 0.0
  %v382 = vmax.f32 %v368, 0.0
  %v383 = vmax.f32 %v373, 0.0
  %v384 = vmax.f32 %v378, 0.0
  %385 = vst [vmem:[%s3] sm:$0xff] %v381
  %386 = vst [vmem:[%s3 + $0x8] sm:$0xff] %v382
  %387 = vst [vmem:[%s3 + $0x10] sm:$0xff] %v383
  %388 = vst [vmem:[%s3 + $0x18] sm:$0xff] %v384
  // Predicated region
  $region14: #{forward.7} parent=0 // pred_check
    _
  $region15: #{forward.7} parent=0 // pred_check_branch
    %390 = sbr.rel (0) target = $region17
  $region16: #{forward.7} parent=0 // pred_region
    _
  $region17: #{forward.7} parent=0 // pred_fallthru
    _
  // Predicated region
  $region18: #{forward.7} parent=0 // pred_check
    _
  $region19: #{forward.7} parent=0 // pred_check_branch
    %392 = sbr.rel (0) target = $region21
  $region20: #{forward.7} parent=0 // pred_region
    _
  $region21: #{forward.7} parent=0 // pred_fallthru
    _

// kernel: forward.8
$region0: #{forward.8}
  #allocation0 [shape = 'u32[]', space=smem, size = 0x4, offset = 0x4, fixed_abs, tag = 'smem constant byte address 0x4 - core index']
  #allocation1 [shape = 'u32[144,128]{1,0:T(1,128)}', space=vmem, size = 0x12000, scoped, tag = 'internal scratch']
  %s0 = inlined_call_operand.vmem [shape: f32[32,128], index: 0, kind: input, shape index: {}]
  %s1 = inlined_call_operand.vmem [shape: f32[128,128], index: 1, kind: input, shape index: {}]
  %s2 = inlined_call_operand.vmem [shape: f32[1,128], index: 2, kind: input, shape index: {}]
  %s3 = inlined_call_operand.vmem [shape: f32[32,128], index: 3, kind: output, shape index: {}]
  %s4 = sld [smem:[#allocation0]]
  $region22: #{forward.8} parent=0
    _
  %s6 = ssub.s32 1, %s4
  %s7 = scalar_select 0, %s6, %s4
  // Predicated region
  $region2: #{forward.8} parent=0 // pred_check
    _
  $region3: #{forward.8} parent=0 // pred_check_branch
    %9 = sbr.rel (0) target = $region5
  $region4: #{forward.8} parent=0 // pred_region
    _
  $region5: #{forward.8} parent=0 // pred_fallthru
    _
  // Predicated region
  $region6: #{forward.8} parent=0 // pred_check
    _
  $region7: #{forward.8} parent=0 // pred_check_branch
    %11 = sbr.rel (0) target = $region9
  $region8: #{forward.8} parent=0 // pred_region
    _
  $region9: #{forward.8} parent=0 // pred_fallthru
    _
  // Predicated region
  $region10: #{forward.8} parent=0 // pred_check
    _
  $region11: #{forward.8} parent=0 // pred_check_branch
    %13 = sbr.rel (0) target = $region13
  $region12: #{forward.8} parent=0 // pred_region
    _
  $region13: #{forward.8} parent=0 // pred_fallthru
    _
  %v14 = vld [vmem:[%s0] sm:$0xff]
  %v15 = vld [vmem:[%s0 + $0x8] sm:$0xff]
  %v16 = vld [vmem:[%s0 + $0x10] sm:$0xff]
  %v17 = vld [vmem:[%s0 + $0x18] sm:$0xff]
  %v18 = vld [vmem:[%s1] sm:$0xff]
  %v19 = vld [vmem:[%s1 + $0x8] sm:$0xff]
  %v20 = vld [vmem:[%s1 + $0x10] sm:$0xff]
  %v21 = vld [vmem:[%s1 + $0x18] sm:$0xff]
  %v22 = vld [vmem:[%s1 + $0x20] sm:$0xff]
  %v23 = vld [vmem:[%s1 + $0x28] sm:$0xff]
  %v24 = vld [vmem:[%s1 + $0x30] sm:$0xff]
  %v25 = vld [vmem:[%s1 + $0x38] sm:$0xff]
  %v26 = vld [vmem:[%s1 + $0x40] sm:$0xff]
  %v27 = vld [vmem:[%s1 + $0x48] sm:$0xff]
  %v28 = vld [vmem:[%s1 + $0x50] sm:$0xff]
  %v29 = vld [vmem:[%s1 + $0x58] sm:$0xff]
  %v30 = vld [vmem:[%s1 + $0x60] sm:$0xff]
  %v31 = vld [vmem:[%s1 + $0x68] sm:$0xff]
  %v32 = vld [vmem:[%s1 + $0x70] sm:$0xff]
  %v33 = vld [vmem:[%s1 + $0x78] sm:$0xff]
  %v34 = vld [vmem:[%s2] sm:$0x1]
  %v36 = vlaneseq
  %v37 = vshrl.u32 %v36, 7
  %v38 = vsub.s32 0, %v37
  %v39 = vrot.slane %v34, %v38
  %41 = vmatprep.subr.mxu0 0.0
  %42 = vmatpush1.msra.mxu0 %v18
  %43 = vmatprep.subr.mxu0 0.0
  %44 = vmatpush1.msra.mxu0 %v19
  %45 = vmatprep.subr.mxu0 0.0
  %46 = vmatpush1.msra.mxu0 %v20
  %47 = vmatprep.subr.mxu0 0.0
  %48 = vmatpush1.msra.mxu0 %v21
  %49 = vmatprep.subr.mxu0 0.0
  %50 = vmatpush1.msra.mxu0 %v22
  %51 = vmatprep.subr.mxu0 0.0
  %52 = vmatpush1.msra.mxu0 %v23
  %53 = vmatprep.subr.mxu0 0.0
  %54 = vmatpush1.msra.mxu0 %v24
  %55 = vmatprep.subr.mxu0 0.0
  %56 = vmatpush1.msra.mxu0 %v25
  %57 = vmatprep.subr.mxu0 0.0
  %58 = vmatpush1.msra.mxu0 %v26
  %59 = vmatprep.subr.mxu0 0.0
  %60 = vmatpush1.msra.mxu0 %v27
  %61 = vmatprep.subr.mxu0 0.0
  %62 = vmatpush1.msra.mxu0 %v28
  %63 = vmatprep.subr.mxu0 0.0
  %64 = vmatpush1.msra.mxu0 %v29
  %65 = vmatprep.subr.mxu0 0.0
  %66 = vmatpush1.msra.mxu0 %v30
  %67 = vmatprep.subr.mxu0 0.0
  %68 = vmatpush1.msra.mxu0 %v31
  %69 = vmatprep.subr.mxu0 0.0
  %70 = vmatpush1.msra.mxu0 %v32
  %71 = vmatprep.subr.mxu0 0.0
  %72 = vmatpush1.msra.mxu0 %v33
  %73 = vmatprep.subr.mxu0 0.0
  %74 = vmatpush1.msra.mxu0 0.0
  %75 = vmatprep.subr.mxu0 0.0
  %76 = vmatpush1.msra.mxu0 0.0
  %77 = vmatprep.subr.mxu0 0.0
  %78 = vmatpush1.msra.mxu0 0.0
  %79 = vmatprep.subr.mxu0 0.0
  %80 = vmatpush1.msra.mxu0 0.0
  %81 = vmatprep.subr.mxu0 0.0
  %82 = vmatpush1.msra.mxu0 0.0
  %83 = vmatprep.subr.mxu0 0.0
  %84 = vmatpush1.msra.mxu0 0.0
  %85 = vmatprep.subr.mxu0 0.0
  %86 = vmatpush1.msra.mxu0 0.0
  %87 = vmatprep.subr.mxu0 0.0
  %88 = vmatpush1.msra.mxu0 0.0
  %89 = vmatprep.subr.mxu0 0.0
  %90 = vmatpush1.msra.mxu0 0.0
  %91 = vmatprep.subr.mxu0 0.0
  %92 = vmatpush1.msra.mxu0 0.0
  %93 = vmatprep.subr.mxu0 0.0
  %94 = vmatpush1.msra.mxu0 0.0
  %95 = vmatprep.subr.mxu0 0.0
  %96 = vmatpush1.msra.mxu0 0.0
  %97 = vmatprep.subr.mxu0 0.0
  %98 = vmatpush1.msra.mxu0 0.0
  %99 = vmatprep.subr.mxu0 0.0
  %100 = vmatpush1.msra.mxu0 0.0
  %101 = vmatprep.subr.mxu0 0.0
  %102 = vmatpush1.msra.mxu0 0.0
  %103 = vmatprep.subr.mxu0 0.0
  %104 = vmatpush1.msra.mxu0 0.0
  %105 = vmatprep.mubr.f32.mxu0 0.0
  %106 = vmatmul.mubr.f32.gmra.mrb[0].mxu0 %v14
  %v107 = vpop.f32.mrb[0].mxu0
  %v108 = vadd.f32 %v39, %v107
  %v109 = vpop.f32.mrb[0].mxu0
  %110 = vmatprep.mubr.f32.mxu0 0.0
  %111 = vmatmul.mubr.f32.gmra.mrb[0].mxu0 %v15
  %v112 = vpop.f32.mrb[0].mxu0
  %v113 = vadd.f32 %v39, %v112
  %v114 = vpop.f32.mrb[0].mxu0
  %115 = vmatprep.mubr.f32.mxu0 0.0
  %116 = vmatmul.mubr.f32.gmra.mrb[0].mxu0 %v16
  %v117 = vpop.f32.mrb[0].mxu0
  %v118 = vadd.f32 %v39, %v117
  %v119 = vpop.f32.mrb[0].mxu0
  %120 = vmatprep.mubr.f32.mxu0 0.0
  %121 = vmatmul.mubr.f32.gmra.mrb[0].mxu0 %v17
  %v122 = vpop.f32.mrb[0].mxu0
  %v123 = vadd.f32 %v39, %v122
  %v124 = vpop.f32.mrb[0].mxu0
  %125 = vdwg.mxu0
  %v126 = vmax.f32 %v108, 0.0
  %v127 = vmax.f32 %v113, 0.0
  %v128 = vmax.f32 %v118, 0.0
  %v129 = vmax.f32 %v123, 0.0
  %130 = vst [vmem:[%s3] sm:$0xff] %v126
  %131 = vst [vmem:[%s3 + $0x8] sm:$0xff] %v127
  %132 = vst [vmem:[%s3 + $0x10] sm:$0xff] %v128
  %133 = vst [vmem:[%s3 + $0x18] sm:$0xff] %v129
  // Predicated region
  $region14: #{forward.8} parent=0 // pred_check
    _
  $region15: #{forward.8} parent=0 // pred_check_branch
    %135 = sbr.rel (0) target = $region17
  $region16: #{forward.8} parent=0 // pred_region
    _
  $region17: #{forward.8} parent=0 // pred_fallthru
    _
  // Predicated region
  $region18: #{forward.8} parent=0 // pred_check
    _
  $region19: #{forward.8} parent=0 // pred_check_branch
    %137 = sbr.rel (0) target = $region21
  $region20: #{forward.8} parent=0 // pred_region
    _
  $region21: #{forward.8} parent=0 // pred_fallthru
    _

// kernel: forward.9
$region0: #{forward.9}
  #allocation0 [shape = 'u32[]', space=smem, size = 0x4, offset = 0x4, fixed_abs, tag = 'smem constant byte address 0x4 - core index']
  #allocation1 [shape = 'u32[144,128]{1,0:T(1,128)}', space=vmem, size = 0x12000, scoped, tag = 'internal scratch']
  %s0 = inlined_call_operand.vmem [shape: f32[2,256], index: 0, kind: input, shape index: {}]
  %s1 = inlined_call_operand.vmem [shape: f32[2,256], index: 1, kind: input, shape index: {}]
  %s2 = inlined_call_operand.vmem [shape: f32[256,256], index: 2, kind: input, shape index: {}]
  %s3 = inlined_call_operand.vmem [shape: f32[1,256], index: 3, kind: input, shape index: {}]
  %s4 = inlined_call_operand.vmem [shape: f32[256,128], index: 4, kind: input, shape index: {}]
  %s5 = inlined_call_operand.vmem [shape: f32[1,128], index: 5, kind: input, shape index: {}]
  %s6 = inlined_call_operand.vmem [shape: f32[256,128], index: 6, kind: input, shape index: {}]
  %s7 = inlined_call_operand.vmem [shape: f32[1,128], index: 7, kind: input, shape index: {}]
  %s8 = inlined_call_operand.vmem [shape: f32[2,128], index: 8, kind: output, shape index: {0}]
  %s9 = inlined_call_operand.hbm [shape: f32[2,128], index: 9, kind: output, shape index: {1}]
  %10 = xla_tuple %s8, %s9
  %s11 = sld [smem:[#allocation0]]
  $region50: #{forward.9} parent=0
    _
  %s13 = ssub.s32 1, %s11
  %s14 = scalar_select 0, %s13, %s11
  $region1: #{forward.9} parent=0
    #allocation2 [shape = 'u8[1024]{0}', space=vmem, size = 0x400, scoped, tag = 'output window, operand 1, single buffered']
    #allocation3 [shape = 's32[1]{0}', space=sflag, size = 0x4, scoped, tag = 'scoped memory for forward.9']
    %15 = vsyncpa [#allocation3], 0
    // Predicated region
    $region2: #{forward.9} parent=1 // pred_check
      _
    $region3: #{forward.9} parent=1 // pred_check_branch
      %17 = sbr.rel (0) target = $region5
    $region4: #{forward.9} parent=1 // pred_region
      _
    $region5: #{forward.9} parent=1 // pred_fallthru
      _
    // Predicated region
    $region6: #{forward.9} parent=1 // pred_check
      _
    $region7: #{forward.9} parent=1 // pred_check_branch
      %19 = sbr.rel (0) target = $region9
    $region8: #{forward.9} parent=1 // pred_region
      _
    $region9: #{forward.9} parent=1 // pred_fallthru
      _
    // Predicated region
    $region10: #{forward.9} parent=1 // pred_check
      _
    $region11: #{forward.9} parent=1 // pred_check_branch
      %21 = sbr.rel (0) target = $region13
    $region12: #{forward.9} parent=1 // pred_region
      _
    $region13: #{forward.9} parent=1 // pred_fallthru
      _
    // Predicated region
    $region14: #{forward.9} parent=1 // pred_check
      _
    $region15: #{forward.9} parent=1 // pred_check_branch
      %23 = sbr.rel (0) target = $region17
    $region16: #{forward.9} parent=1 // pred_region
      _
    $region17: #{forward.9} parent=1 // pred_fallthru
      _
    // Predicated region
    $region18: #{forward.9} parent=1 // pred_check
      _
    $region19: #{forward.9} parent=1 // pred_check_branch
      %25 = sbr.rel (0) target = $region21
    $region20: #{forward.9} parent=1 // pred_region
      _
    $region21: #{forward.9} parent=1 // pred_fallthru
      _
    // Predicated region
    $region22: #{forward.9} parent=1 // pred_check
      _
    $region23: #{forward.9} parent=1 // pred_check_branch
      %27 = sbr.rel (0) target = $region25
    $region24: #{forward.9} parent=1 // pred_region
      _
    $region25: #{forward.9} parent=1 // pred_fallthru
      _
    // Predicated region
    $region26: #{forward.9} parent=1 // pred_check
      _
    $region27: #{forward.9} parent=1 // pred_check_branch
      %29 = sbr.rel (0) target = $region29
    $region28: #{forward.9} parent=1 // pred_region
      _
    $region29: #{forward.9} parent=1 // pred_fallthru
      _
    // Predicated region
    $region30: #{forward.9} parent=1 // pred_check
      _
    $region31: #{forward.9} parent=1 // pred_check_branch
      %31 = sbr.rel (0) target = $region33
    $region32: #{forward.9} parent=1 // pred_region
      _
    $region33: #{forward.9} parent=1 // pred_fallthru
      _
    %v32 = vld [vmem:[%s0] sm:$0xf]
    %v33 = vld [vmem:[%s2] sm:$0xff]
    %v34 = vld [vmem:[%s2 + $0x8] sm:$0xff]
    %v35 = vld [vmem:[%s2 + $0x10] sm:$0xff]
    %v36 = vld [vmem:[%s2 + $0x18] sm:$0xff]
    %v37 = vld [vmem:[%s2 + $0x20] sm:$0xff]
    %v38 = vld [vmem:[%s2 + $0x28] sm:$0xff]
    %v39 = vld [vmem:[%s2 + $0x30] sm:$0xff]
    %v40 = vld [vmem:[%s2 + $0x38] sm:$0xff]
    %v41 = vld [vmem:[%s2 + $0x40] sm:$0xff]
    %v42 = vld [vmem:[%s2 + $0x48] sm:$0xff]
    %v43 = vld [vmem:[%s2 + $0x50] sm:$0xff]
    %v44 = vld [vmem:[%s2 + $0x58] sm:$0xff]
    %v45 = vld [vmem:[%s2 + $0x60] sm:$0xff]
    %v46 = vld [vmem:[%s2 + $0x68] sm:$0xff]
    %v47 = vld [vmem:[%s2 + $0x70] sm:$0xff]
    %v48 = vld [vmem:[%s2 + $0x78] sm:$0xff]
    %v49 = vld [vmem:[%s2 + $0x80] sm:$0xff]
    %v50 = vld [vmem:[%s2 + $0x88] sm:$0xff]
    %v51 = vld [vmem:[%s2 + $0x90] sm:$0xff]
    %v52 = vld [vmem:[%s2 + $0x98] sm:$0xff]
    %v53 = vld [vmem:[%s2 + $0xa0] sm:$0xff]
    %v54 = vld [vmem:[%s2 + $0xa8] sm:$0xff]
    %v55 = vld [vmem:[%s2 + $0xb0] sm:$0xff]
    %v56 = vld [vmem:[%s2 + $0xb8] sm:$0xff]
    %v57 = vld [vmem:[%s2 + $0xc0] sm:$0xff]
    %v58 = vld [vmem:[%s2 + $0xc8] sm:$0xff]
    %v59 = vld [vmem:[%s2 + $0xd0] sm:$0xff]
    %v60 = vld [vmem:[%s2 + $0xd8] sm:$0xff]
    %v61 = vld [vmem:[%s2 + $0xe0] sm:$0xff]
    %v62 = vld [vmem:[%s2 + $0xe8] sm:$0xff]
    %v63 = vld [vmem:[%s2 + $0xf0] sm:$0xff]
    %v64 = vld [vmem:[%s2 + $0xf8] sm:$0xff]
    %v65 = vld [vmem:[%s2 + $0x100] sm:$0xff]
    %v66 = vld [vmem:[%s2 + $0x108] sm:$0xff]
    %v67 = vld [vmem:[%s2 + $0x110] sm:$0xff]
    %v68 = vld [vmem:[%s2 + $0x118] sm:$0xff]
    %v69 = vld [vmem:[%s2 + $0x120] sm:$0xff]
    %v70 = vld [vmem:[%s2 + $0x128] sm:$0xff]
    %v71 = vld [vmem:[%s2 + $0x130] sm:$0xff]
    %v72 = vld [vmem:[%s2 + $0x138] sm:$0xff]
    %v73 = vld [vmem:[%s2 + $0x140] sm:$0xff]
    %v74 = vld [vmem:[%s2 + $0x148] sm:$0xff]
    %v75 = vld [vmem:[%s2 + $0x150] sm:$0xff]
    %v76 = vld [vmem:[%s2 + $0x158] sm:$0xff]
    %v77 = vld [vmem:[%s2 + $0x160] sm:$0xff]
    %v78 = vld [vmem:[%s2 + $0x168] sm:$0xff]
    %v79 = vld [vmem:[%s2 + $0x170] sm:$0xff]
    %v80 = vld [vmem:[%s2 + $0x178] sm:$0xff]
    %v81 = vld [vmem:[%s2 + $0x180] sm:$0xff]
    %v82 = vld [vmem:[%s2 + $0x188] sm:$0xff]
    %v83 = vld [vmem:[%s2 + $0x190] sm:$0xff]
    %v84 = vld [vmem:[%s2 + $0x198] sm:$0xff]
    %v85 = vld [vmem:[%s2 + $0x1a0] sm:$0xff]
    %v86 = vld [vmem:[%s2 + $0x1a8] sm:$0xff]
    %v87 = vld [vmem:[%s2 + $0x1b0] sm:$0xff]
    %v88 = vld [vmem:[%s2 + $0x1b8] sm:$0xff]
    %v89 = vld [vmem:[%s2 + $0x1c0] sm:$0xff]
    %v90 = vld [vmem:[%s2 + $0x1c8] sm:$0xff]
    %v91 = vld [vmem:[%s2 + $0x1d0] sm:$0xff]
    %v92 = vld [vmem:[%s2 + $0x1d8] sm:$0xff]
    %v93 = vld [vmem:[%s2 + $0x1e0] sm:$0xff]
    %v94 = vld [vmem:[%s2 + $0x1e8] sm:$0xff]
    %v95 = vld [vmem:[%s2 + $0x1f0] sm:$0xff]
    %v96 = vld [vmem:[%s2 + $0x1f8] sm:$0xff]
    %v97 = vld [vmem:[%s3] sm:$0x3]
    %v99 = vlaneseq
    %v100 = vshrl.u32 %v99, 7
    %v101 = vsub.s32 0, %v100
    %v102 = vrot.slane %v97, %v101
    %v103 = vlaneseq
    %v104 = vshrl.u32 %v103, 7
    %v105 = vsub.s32 1, %v104
    %v106 = vrot.slane %v97, %v105
    %v111 = vunpack.c.l.s4 1983009808
    %v112 = vunpack.c.0.s8 %v111
    %v113 = vlaneseq
    %v114 = vshrl.u32 %v113, 7
    %v115 = vsub.s32 %v112, %v114
    %v116 = vrot.slane %v32, %v115
    %v117 = vcombine.high %v116, %v116
    %120 = vmatprep.subr.mxu0 %v34
    %121 = vmatpush1.msra.mxu0 %v33
    %122 = vmatprep.subr.mxu0 %v36
    %123 = vmatpush1.msra.mxu0 %v35
    %124 = vmatprep.subr.mxu0 %v38
    %125 = vmatpush1.msra.mxu0 %v37
    %126 = vmatprep.subr.mxu0 %v40
    %127 = vmatpush1.msra.mxu0 %v39
    %128 = vmatprep.subr.mxu0 %v42
    %129 = vmatpush1.msra.mxu0 %v41
    %130 = vmatprep.subr.mxu0 %v44
    %131 = vmatpush1.msra.mxu0 %v43
    %132 = vmatprep.subr.mxu0 %v46
    %133 = vmatpush1.msra.mxu0 %v45
    %134 = vmatprep.subr.mxu0 %v48
    %135 = vmatpush1.msra.mxu0 %v47
    %136 = vmatprep.subr.mxu0 %v50
    %137 = vmatpush1.msra.mxu0 %v49
    %138 = vmatprep.subr.mxu0 %v52
    %139 = vmatpush1.msra.mxu0 %v51
    %140 = vmatprep.subr.mxu0 %v54
    %141 = vmatpush1.msra.mxu0 %v53
    %142 = vmatprep.subr.mxu0 %v56
    %143 = vmatpush1.msra.mxu0 %v55
    %144 = vmatprep.subr.mxu0 %v58
    %145 = vmatpush1.msra.mxu0 %v57
    %146 = vmatprep.subr.mxu0 %v60
    %147 = vmatpush1.msra.mxu0 %v59
    %148 = vmatprep.subr.mxu0 %v62
    %149 = vmatpush1.msra.mxu0 %v61
    %150 = vmatprep.subr.mxu0 %v64
    %151 = vmatpush1.msra.mxu0 %v63
    %152 = vmatprep.subr.mxu0 %v66
    %153 = vmatpush1.msra.mxu0 %v65
    %154 = vmatprep.subr.mxu0 %v68
    %155 = vmatpush1.msra.mxu0 %v67
    %156 = vmatprep.subr.mxu0 %v70
    %157 = vmatpush1.msra.mxu0 %v69
    %158 = vmatprep.subr.mxu0 %v72
    %159 = vmatpush1.msra.mxu0 %v71
    %160 = vmatprep.subr.mxu0 %v74
    %161 = vmatpush1.msra.mxu0 %v73
    %162 = vmatprep.subr.mxu0 %v76
    %163 = vmatpush1.msra.mxu0 %v75
    %164 = vmatprep.subr.mxu0 %v78
    %165 = vmatpush1.msra.mxu0 %v77
    %166 = vmatprep.subr.mxu0 %v80
    %167 = vmatpush1.msra.mxu0 %v79
    %168 = vmatprep.subr.mxu0 %v82
    %169 = vmatpush1.msra.mxu0 %v81
    %170 = vmatprep.subr.mxu0 %v84
    %171 = vmatpush1.msra.mxu0 %v83
    %172 = vmatprep.subr.mxu0 %v86
    %173 = vmatpush1.msra.mxu0 %v85
    %174 = vmatprep.subr.mxu0 %v88
    %175 = vmatpush1.msra.mxu0 %v87
    %176 = vmatprep.subr.mxu0 %v90
    %177 = vmatpush1.msra.mxu0 %v89
    %178 = vmatprep.subr.mxu0 %v92
    %179 = vmatpush1.msra.mxu0 %v91
    %180 = vmatprep.subr.mxu0 %v94
    %181 = vmatpush1.msra.mxu0 %v93
    %182 = vmatprep.subr.mxu0 %v96
    %183 = vmatpush1.msra.mxu0 %v95
    %184 = vmatprep.mubr.f32.mxu0 %v117
    %185 = vmatmul.mubr.f32.gmra.mrb[0].mxu0 %v116
    %v186 = vpop.f32.mrb[0].mxu0
    %v187 = vadd.f32 %v102, %v186
    %v188 = vpop.f32.mrb[0].mxu0
    %v189 = vadd.f32 %v106, %v188
    %190 = vdwg.mxu0
    %v191 = vmax.f32 %v187, 0.0
    %v192 = vmax.f32 %v189, 0.0
    %v193 = vld [vmem:[%s4] sm:$0xff]
    %v194 = vld [vmem:[%s4 + $0x8] sm:$0xff]
    %v195 = vld [vmem:[%s4 + $0x10] sm:$0xff]
    %v196 = vld [vmem:[%s4 + $0x18] sm:$0xff]
    %v197 = vld [vmem:[%s4 + $0x20] sm:$0xff]
    %v198 = vld [vmem:[%s4 + $0x28] sm:$0xff]
    %v199 = vld [vmem:[%s4 + $0x30] sm:$0xff]
    %v200 = vld [vmem:[%s4 + $0x38] sm:$0xff]
    %v201 = vld [vmem:[%s4 + $0x40] sm:$0xff]
    %v202 = vld [vmem:[%s4 + $0x48] sm:$0xff]
    %v203 = vld [vmem:[%s4 + $0x50] sm:$0xff]
    %v204 = vld [vmem:[%s4 + $0x58] sm:$0xff]
    %v205 = vld [vmem:[%s4 + $0x60] sm:$0xff]
    %v206 = vld [vmem:[%s4 + $0x68] sm:$0xff]
    %v207 = vld [vmem:[%s4 + $0x70] sm:$0xff]
    %v208 = vld [vmem:[%s4 + $0x78] sm:$0xff]
    %v209 = vld [vmem:[%s4 + $0x80] sm:$0xff]
    %v210 = vld [vmem:[%s4 + $0x88] sm:$0xff]
    %v211 = vld [vmem:[%s4 + $0x90] sm:$0xff]
    %v212 = vld [vmem:[%s4 + $0x98] sm:$0xff]
    %v213 = vld [vmem:[%s4 + $0xa0] sm:$0xff]
    %v214 = vld [vmem:[%s4 + $0xa8] sm:$0xff]
    %v215 = vld [vmem:[%s4 + $0xb0] sm:$0xff]
    %v216 = vld [vmem:[%s4 + $0xb8] sm:$0xff]
    %v217 = vld [vmem:[%s4 + $0xc0] sm:$0xff]
    %v218 = vld [vmem:[%s4 + $0xc8] sm:$0xff]
    %v219 = vld [vmem:[%s4 + $0xd0] sm:$0xff]
    %v220 = vld [vmem:[%s4 + $0xd8] sm:$0xff]
    %v221 = vld [vmem:[%s4 + $0xe0] sm:$0xff]
    %v222 = vld [vmem:[%s4 + $0xe8] sm:$0xff]
    %v223 = vld [vmem:[%s4 + $0xf0] sm:$0xff]
    %v224 = vld [vmem:[%s4 + $0xf8] sm:$0xff]
    %v225 = vld [vmem:[%s5] sm:$0x1]
    %v227 = vlaneseq
    %v228 = vshrl.u32 %v227, 7
    %v229 = vsub.s32 0, %v228
    %v230 = vrot.slane %v225, %v229
    %232 = vmatprep.subr.mxu0 0.0
    %233 = vmatpush1.msra.mxu0 %v193
    %234 = vmatprep.subr.mxu0 0.0
    %235 = vmatpush1.msra.mxu0 %v194
    %236 = vmatprep.subr.mxu0 0.0
    %237 = vmatpush1.msra.mxu0 %v195
    %238 = vmatprep.subr.mxu0 0.0
    %239 = vmatpush1.msra.mxu0 %v196
    %240 = vmatprep.subr.mxu0 0.0
    %241 = vmatpush1.msra.mxu0 %v197
    %242 = vmatprep.subr.mxu0 0.0
    %243 = vmatpush1.msra.mxu0 %v198
    %244 = vmatprep.subr.mxu0 0.0
    %245 = vmatpush1.msra.mxu0 %v199
    %246 = vmatprep.subr.mxu0 0.0
    %247 = vmatpush1.msra.mxu0 %v200
    %248 = vmatprep.subr.mxu0 0.0
    %249 = vmatpush1.msra.mxu0 %v201
    %250 = vmatprep.subr.mxu0 0.0
    %251 = vmatpush1.msra.mxu0 %v202
    %252 = vmatprep.subr.mxu0 0.0
    %253 = vmatpush1.msra.mxu0 %v203
    %254 = vmatprep.subr.mxu0 0.0
    %255 = vmatpush1.msra.mxu0 %v204
    %256 = vmatprep.subr.mxu0 0.0
    %257 = vmatpush1.msra.mxu0 %v205
    %258 = vmatprep.subr.mxu0 0.0
    %259 = vmatpush1.msra.mxu0 %v206
    %260 = vmatprep.subr.mxu0 0.0
    %261 = vmatpush1.msra.mxu0 %v207
    %262 = vmatprep.subr.mxu0 0.0
    %263 = vmatpush1.msra.mxu0 %v208
    %264 = vmatprep.subr.mxu0 0.0
    %265 = vmatpush1.msra.mxu0 %v209
    %266 = vmatprep.subr.mxu0 0.0
    %267 = vmatpush1.msra.mxu0 %v210
    %268 = vmatprep.subr.mxu0 0.0
    %269 = vmatpush1.msra.mxu0 %v211
    %270 = vmatprep.subr.mxu0 0.0
    %271 = vmatpush1.msra.mxu0 %v212
    %272 = vmatprep.subr.mxu0 0.0
    %273 = vmatpush1.msra.mxu0 %v213
    %274 = vmatprep.subr.mxu0 0.0
    %275 = vmatpush1.msra.mxu0 %v214
    %276 = vmatprep.subr.mxu0 0.0
    %277 = vmatpush1.msra.mxu0 %v215
    %278 = vmatprep.subr.mxu0 0.0
    %279 = vmatpush1.msra.mxu0 %v216
    %280 = vmatprep.subr.mxu0 0.0
    %281 = vmatpush1.msra.mxu0 %v217
    %282 = vmatprep.subr.mxu0 0.0
    %283 = vmatpush1.msra.mxu0 %v218
    %284 = vmatprep.subr.mxu0 0.0
    %285 = vmatpush1.msra.mxu0 %v219
    %286 = vmatprep.subr.mxu0 0.0
    %287 = vmatpush1.msra.mxu0 %v220
    %288 = vmatprep.subr.mxu0 0.0
    %289 = vmatpush1.msra.mxu0 %v221
    %290 = vmatprep.subr.mxu0 0.0
    %291 = vmatpush1.msra.mxu0 %v222
    %292 = vmatprep.subr.mxu0 0.0
    %293 = vmatpush1.msra.mxu0 %v223
    %294 = vmatprep.subr.mxu0 0.0
    %295 = vmatpush1.msra.mxu0 %v224
    %296 = vmatprep.mubr.f32.mxu0 %v192
    %297 = vmatmul.mubr.f32.gmra.mrb[0].mxu0 %v191
    %v298 = vpop.f32.mrb[0].mxu0
    %v299 = vadd.f32 %v230, %v298
    %v300 = vpop.f32.mrb[0].mxu0
    %301 = vdwg.mxu0
    %v302 = vtanh.pop %v299
    %303 = vst [vmem:[%s8] sm:$0x3] %v302
    %v304 = vld [vmem:[%s1] sm:$0xf]
    %v305 = vld [vmem:[%s6] sm:$0xff]
    %v306 = vld [vmem:[%s6 + $0x8] sm:$0xff]
    %v307 = vld [vmem:[%s6 + $0x10] sm:$0xff]
    %v308 = vld [vmem:[%s6 + $0x18] sm:$0xff]
    %v309 = vld [vmem:[%s6 + $0x20] sm:$0xff]
    %v310 = vld [vmem:[%s6 + $0x28] sm:$0xff]
    %v311 = vld [vmem:[%s6 + $0x30] sm:$0xff]
    %v312 = vld [vmem:[%s6 + $0x38] sm:$0xff]
    %v313 = vld [vmem:[%s6 + $0x40] sm:$0xff]
    %v314 = vld [vmem:[%s6 + $0x48] sm:$0xff]
    %v315 = vld [vmem:[%s6 + $0x50] sm:$0xff]
    %v316 = vld [vmem:[%s6 + $0x58] sm:$0xff]
    %v317 = vld [vmem:[%s6 + $0x60] sm:$0xff]
    %v318 = vld [vmem:[%s6 + $0x68] sm:$0xff]
    %v319 = vld [vmem:[%s6 + $0x70] sm:$0xff]
    %v320 = vld [vmem:[%s6 + $0x78] sm:$0xff]
    %v321 = vld [vmem:[%s6 + $0x80] sm:$0xff]
    %v322 = vld [vmem:[%s6 + $0x88] sm:$0xff]
    %v323 = vld [vmem:[%s6 + $0x90] sm:$0xff]
    %v324 = vld [vmem:[%s6 + $0x98] sm:$0xff]
    %v325 = vld [vmem:[%s6 + $0xa0] sm:$0xff]
    %v326 = vld [vmem:[%s6 + $0xa8] sm:$0xff]
    %v327 = vld [vmem:[%s6 + $0xb0] sm:$0xff]
    %v328 = vld [vmem:[%s6 + $0xb8] sm:$0xff]
    %v329 = vld [vmem:[%s6 + $0xc0] sm:$0xff]
    %v330 = vld [vmem:[%s6 + $0xc8] sm:$0xff]
    %v331 = vld [vmem:[%s6 + $0xd0] sm:$0xff]
    %v332 = vld [vmem:[%s6 + $0xd8] sm:$0xff]
    %v333 = vld [vmem:[%s6 + $0xe0] sm:$0xff]
    %v334 = vld [vmem:[%s6 + $0xe8] sm:$0xff]
    %v335 = vld [vmem:[%s6 + $0xf0] sm:$0xff]
    %v336 = vld [vmem:[%s6 + $0xf8] sm:$0xff]
    %v337 = vld [vmem:[%s7] sm:$0x1]
    %v339 = vlaneseq
    %v340 = vshrl.u32 %v339, 7
    %v341 = vsub.s32 0, %v340
    %v342 = vrot.slane %v337, %v341
    %v346 = vunpack.c.l.s4 1983009808
    %v347 = vunpack.c.0.s8 %v346
    %v348 = vlaneseq
    %v349 = vshrl.u32 %v348, 7
    %v350 = vsub.s32 %v347, %v349
    %v351 = vrot.slane %v304, %v350
    %v352 = vcombine.high %v351, %v351
    %355 = vmatprep.subr.mxu0 0.0
    %356 = vmatpush1.msra.mxu0 %v305
    %357 = vmatprep.subr.mxu0 0.0
    %358 = vmatpush1.msra.mxu0 %v306
    %359 = vmatprep.subr.mxu0 0.0
    %360 = vmatpush1.msra.mxu0 %v307
    %361 = vmatprep.subr.mxu0 0.0
    %362 = vmatpush1.msra.mxu0 %v308
    %363 = vmatprep.subr.mxu0 0.0
    %364 = vmatpush1.msra.mxu0 %v309
    %365 = vmatprep.subr.mxu0 0.0
    %366 = vmatpush1.msra.mxu0 %v310
    %367 = vmatprep.subr.mxu0 0.0
    %368 = vmatpush1.msra.mxu0 %v311
    %369 = vmatprep.subr.mxu0 0.0
    %370 = vmatpush1.msra.mxu0 %v312
    %371 = vmatprep.subr.mxu0 0.0
    %372 = vmatpush1.msra.mxu0 %v313
    %373 = vmatprep.subr.mxu0 0.0
    %374 = vmatpush1.msra.mxu0 %v314
    %375 = vmatprep.subr.mxu0 0.0
    %376 = vmatpush1.msra.mxu0 %v315
    %377 = vmatprep.subr.mxu0 0.0
    %378 = vmatpush1.msra.mxu0 %v316
    %379 = vmatprep.subr.mxu0 0.0
    %380 = vmatpush1.msra.mxu0 %v317
    %381 = vmatprep.subr.mxu0 0.0
    %382 = vmatpush1.msra.mxu0 %v318
    %383 = vmatprep.subr.mxu0 0.0
    %384 = vmatpush1.msra.mxu0 %v319
    %385 = vmatprep.subr.mxu0 0.0
    %386 = vmatpush1.msra.mxu0 %v320
    %387 = vmatprep.subr.mxu0 0.0
    %388 = vmatpush1.msra.mxu0 %v321
    %389 = vmatprep.subr.mxu0 0.0
    %390 = vmatpush1.msra.mxu0 %v322
    %391 = vmatprep.subr.mxu0 0.0
    %392 = vmatpush1.msra.mxu0 %v323
    %393 = vmatprep.subr.mxu0 0.0
    %394 = vmatpush1.msra.mxu0 %v324
    %395 = vmatprep.subr.mxu0 0.0
    %396 = vmatpush1.msra.mxu0 %v325
    %397 = vmatprep.subr.mxu0 0.0
    %398 = vmatpush1.msra.mxu0 %v326
    %399 = vmatprep.subr.mxu0 0.0
    %400 = vmatpush1.msra.mxu0 %v327
    %401 = vmatprep.subr.mxu0 0.0
    %402 = vmatpush1.msra.mxu0 %v328
    %403 = vmatprep.subr.mxu0 0.0
    %404 = vmatpush1.msra.mxu0 %v329
    %405 = vmatprep.subr.mxu0 0.0
    %406 = vmatpush1.msra.mxu0 %v330
    %407 = vmatprep.subr.mxu0 0.0
    %408 = vmatpush1.msra.mxu0 %v331
    %409 = vmatprep.subr.mxu0 0.0
    %410 = vmatpush1.msra.mxu0 %v332
    %411 = vmatprep.subr.mxu0 0.0
    %412 = vmatpush1.msra.mxu0 %v333
    %413 = vmatprep.subr.mxu0 0.0
    %414 = vmatpush1.msra.mxu0 %v334
    %415 = vmatprep.subr.mxu0 0.0
    %416 = vmatpush1.msra.mxu0 %v335
    %417 = vmatprep.subr.mxu0 0.0
    %418 = vmatpush1.msra.mxu0 %v336
    %419 = vmatprep.mubr.f32.mxu0 %v352
    %420 = vmatmul.mubr.f32.gmra.mrb[0].mxu0 %v351
    %v421 = vpop.f32.mrb[0].mxu0
    %v422 = vadd.f32 %v342, %v421
    %v423 = vpop.f32.mrb[0].mxu0
    %424 = vdwg.mxu0
    %v425 = vmax.f32 %v422, 0.0
    %426 = vst [vmem:[#allocation2] sm:$0x3] %v425
    // Predicated region
    $region34: #{forward.9} parent=1 // pred_check
      _
    $region35: #{forward.9} parent=1 // pred_check_branch
      %428 = sbr.rel (0) target = $region37
    $region36: #{forward.9} parent=1 // pred_region
      _
    $region37: #{forward.9} parent=1 // pred_fallthru
      _
    // Predicated region
    $region38: #{forward.9} parent=1 // pred_check
      _
    $region39: #{forward.9} parent=1 // pred_check_branch
      %430 = sbr.rel (0) target = $region41
    $region40: #{forward.9} parent=1 // pred_region
      %s432 = ssub.s32 32, 32
      %433 = vsyncadd [#allocation3], %s432
      %s435 = sshll.u32 [#allocation2], 4
      %s436 = int_to_ptr.vmem [resolvable:$true] %s435
      %438 = dma.vmem_to_hbm [thread:$0]  %s436, 32, %s9, [#allocation3]
    $region41: #{forward.9} parent=1 // pred_fallthru
      _
    // Predicated region
    $region42: #{forward.9} parent=1 // pred_check
      _
    $region43: #{forward.9} parent=1 // pred_check_branch
      %440 = sbr.rel (0) target = $region45
    $region44: #{forward.9} parent=1 // pred_region
      _
    $region45: #{forward.9} parent=1 // pred_fallthru
      _
    // Predicated region
    $region46: #{forward.9} parent=1 // pred_check
      _
    $region47: #{forward.9} parent=1 // pred_check_branch
      %442 = sbr.rel (0) target = $region49
    $region48: #{forward.9} parent=1 // pred_region
      %443 = dma.done [#allocation3], 32
    $region49: #{forward.9} parent=1 // pred_fallthru
      _
    %444 = vsyncpa [#allocation3], 1

</llo_original>
